<compile_context>
chip_gen: v7x
topology: tpu7x:2x2x1
jax: 0.10.0
libtpu: 0.0.40
codegen_flags: <defaults>
</compile_context>

<pallas_src>
import jax
import jax.numpy as jnp
from jax.experimental import pallas as pl
from jax.experimental.pallas import tpu as pltpu


# ----------------------------- Pallas kernel --------------------------------
def _make_selector_kernel(btile: int, n_select: int, topk: int, F: int,
                          tau: float, eps: float = 1e-12):
    inv_tau = 1.0 / float(tau)

    def layer_norm(x, g, b):
        mu = jnp.mean(x, axis=-1, keepdims=True)
        var = jnp.mean((x - mu) ** 2, axis=-1, keepdims=True)
        return (x - mu) * jax.lax.rsqrt(var + eps) * g + b

    def kernel(q_ref, kf_ref, vf_ref, g_ref,
               wq_ref, bq_ref, gq_ref, betaq_ref,
               wk_ref, bk_ref, gk_ref, betak_ref,
               out_ref):
        # ---- Q branch: one batched (btile, q_dim) @ (q_dim, dim) MXU matmul + LN ----
        q = jnp.dot(q_ref[...], wq_ref[...],
                    preferred_element_type=jnp.float32) + bq_ref[...]
        qn = layer_norm(q, gq_ref[...], betaq_ref[...])            # (btile, dim)

        # ---- K branch: one batched (btile*n_select, dim) @ (dim, dim) matmul + LN ----
        k = jnp.dot(kf_ref[...], wk_ref[...],
                    preferred_element_type=jnp.float32) + bk_ref[...]
        kn = layer_norm(k, gk_ref[...], betak_ref[...])            # (btile*n_select, dim)
        kn = kn.reshape(btile, n_select, -1)                       # (btile, n_select, dim)

        # ---- logits[b, n] = <kn[b, n, :], qn[b, :]>  (VPU mul + lane reduce, no transpose)
        logits = jnp.sum(kn * qn[:, None, :], axis=-1)             # (btile, n_select)
        logits = logits - jnp.max(logits, axis=-1, keepdims=True)
        e = jnp.exp(logits)
        # NOTE: exact division kept (vs pl.reciprocal(approx=True)) for tight numerical
        # parity with the f32 reference; the kernel is HBM-bound, not VALU-bound.
        probs = e / jnp.sum(e, axis=-1, keepdims=True)             # (btile, n_select)

        # ---- gumbel-softmax selection masks for ALL topk draws at once ----
        h = (probs[:, None, :] + g_ref[...]) * inv_tau             # (btile, topk, n_select)
        h = h - jnp.max(h, axis=-1, keepdims=True)
        eh = jnp.exp(h)
        masks = eh / jnp.sum(eh, axis=-1, keepdims=True)           # (btile, topk, n_select)

        # ---- weighted gather: single batched matmul over V (native dtype, f32 acc) ----
        v = vf_ref[...]                                            # (btile, n_select, F)
        sel = jnp.einsum("btn,bnf->btf", masks.astype(v.dtype), v,
                         preferred_element_type=jnp.float32)       # (btile, topk, F)
        # One lane-dense slab store: last dim = topk*F (multiple of 128).
        out_ref[...] = sel.reshape(btile, topk * F).astype(out_ref.dtype)

    return kernel


# ------------------------------ wrapper --------------------------------------
def selector_forward(Q, K, V, params, gumbel_noise, *, topk, tau=1.0, btile=8):
    """Q: (bs, q_dim, 1), K: (bs, n_select, dim), V: (bs, n_select, nf, obj_num, obj_dim)."""
    bs, q_dim, _ = Q.shape
    _, n_select, dim = K.shape
    nf, obj_num, obj_dim = V.shape[2], V.shape[3], V.shape[4]
    F = nf * obj_num * obj_dim

    btile = max(1, min(btile, bs))
    pad = (-bs) % btile
    bsp = bs + pad

    # LN / softmax math stays f32 (no bf16 VPU/EUP on v5e); V keeps its native dtype
    # (pass bf16 V to halve the dominant HBM traffic — MXU accumulates in f32).
    Q2 = Q[:, :, 0].astype(jnp.float32)                       # (bs, q_dim)
    Kf = K.reshape(bs * n_select, dim).astype(jnp.float32)    # (bs*n_select, dim)
    Vf = V.reshape(bs, n_select, F)                           # (bs, n_select, F), native dtype
    G = gumbel_noise.astype(jnp.float32)                      # (bs, topk, n_select)

    if pad:
        Q2 = jnp.pad(Q2, ((0, pad), (0, 0)))
        Kf = jnp.pad(Kf, ((0, pad * n_select), (0, 0)))
        Vf = jnp.pad(Vf, ((0, pad), (0, 0), (0, 0)))
        G = jnp.pad(G, ((0, pad), (0, 0), (0, 0)))

    kernel = _make_selector_kernel(btile, n_select, topk, F, tau)

    grid_spec = pltpu.PrefetchScalarGridSpec(
        num_scalar_prefetch=0,
        grid=(bsp // btile,),
        in_specs=[
            pl.BlockSpec((btile, q_dim), lambda b: (b, 0)),               # Q
            pl.BlockSpec((btile * n_select, dim), lambda b: (b, 0)),      # K_flat
            pl.BlockSpec((btile, n_select, F), lambda b: (b, 0, 0)),      # V_flat (native dtype)
            pl.BlockSpec((btile, topk, n_select), lambda b: (b, 0, 0)),   # gumbel noise
            # Parameters: constant block index -> DMA'd once, resident in VMEM across steps.
            pl.BlockSpec((q_dim, dim), lambda b: (0, 0)),                 # Wq (transposed)
            pl.BlockSpec((1, dim), lambda b: (0, 0)),                     # bq
            pl.BlockSpec((1, dim), lambda b: (0, 0)),                     # LN_Q gamma
            pl.BlockSpec((1, dim), lambda b: (0, 0)),                     # LN_Q beta
            pl.BlockSpec((dim, dim), lambda b: (0, 0)),                   # Wk (transposed)
            pl.BlockSpec((1, dim), lambda b: (0, 0)),                     # bk
            pl.BlockSpec((1, dim), lambda b: (0, 0)),                     # LN_K gamma
            pl.BlockSpec((1, dim), lambda b: (0, 0)),                     # LN_K beta
        ],
        out_specs=pl.BlockSpec((btile, topk * F), lambda b: (b, 0)),      # lane-dense output slab
    )

    out = pl.pallas_call(
        kernel,
        out_shape=jax.ShapeDtypeStruct((bsp, topk * F), jnp.float32),
        grid_spec=grid_spec,
        compiler_params=pltpu.CompilerParams(dimension_semantics=("parallel",)),
    )(Q2, Kf, Vf, G,
      params["wq"], params["bq"], params["gq"], params["betaq"],
      params["wk"], params["bk"], params["gk"], params["betak"])

    out = out[:bs]
    # (bs, topk*F) -> (bs, topk*nf, obj_num, obj_dim) == torch.cat along dim=1
    return out.reshape(bs, topk * nf, obj_num, obj_dim)


# -------------------------- pure-JAX reference --------------------------------
def selector_reference(Q, K, V, params, gumbel_noise, *, topk, tau=1.0, eps=1e-12):
    bs, q_dim, _ = Q.shape
    _, n_select, dim = K.shape
    nf, obj_num, obj_dim = V.shape[2], V.shape[3], V.shape[4]
    F = nf * obj_num * obj_dim

    def ln(x, g, b):
        mu = jnp.mean(x, axis=-1, keepdims=True)
        var = jnp.mean((x - mu) ** 2, axis=-1, keepdims=True)
        return (x - mu) / jnp.sqrt(var + eps) * g + b

    q = ln(Q[:, :, 0].astype(jnp.float32) @ params["wq"] + params["bq"][0],
           params["gq"][0], params["betaq"][0])
    k = ln(K.astype(jnp.float32) @ params["wk"] + params["bk"][0],
           params["gk"][0], params["betak"][0])
    logits = jnp.einsum("bnd,bd->bn", k, q)
    probs = jax.nn.softmax(logits, axis=-1)

    Vf = V.reshape(bs, n_select, F)
    mask = jax.nn.softmax((probs[:, None, :] + gumbel_noise) / tau, axis=-1)  # (bs, topk, n_select)
    out = jnp.einsum("btn,bnf->btf", mask.astype(Vf.dtype), Vf,
                     preferred_element_type=jnp.float32)                      # (bs, topk, F)
    return out.reshape(bs, topk * nf, obj_num, obj_dim)


# --------------------------------- main ---------------------------------------
if __name__ == "__main__":
    # Small shapes consistent with the module's forward contract.
    bs, q_dim, dim = 16, 128, 128
    n_select, nf, obj_num, obj_dim = 8, 2, 4, 16
    topk, tau = 2, 1.0

    key = jax.random.PRNGKey(0)
    kq, kk, kv, kwq, kwk, kbq, kbk, kg = jax.random.split(key, 8)

    Q = jax.random.normal(kq, (bs, q_dim, 1), jnp.float32)
    K = jax.random.normal(kk, (bs, n_select, dim), jnp.float32)
    V = jax.random.normal(kv, (bs, n_select, nf, obj_num, obj_dim), jnp.float32)

    # Parameter init (weights stored as (in, out), i.e. W^T of nn.Linear).
    params = {
        "wq": jax.random.normal(kwq, (q_dim, dim), jnp.float32) * (1.0 / jnp.sqrt(q_dim)),
        "bq": jax.random.normal(kbq, (1, dim), jnp.float32) * 0.01,
        "gq": jnp.ones((1, dim), jnp.float32),       # LayerNorm defaults
        "betaq": jnp.zeros((1, dim), jnp.float32),
        "wk": jax.random.normal(kwk, (dim, dim), jnp.float32) * (1.0 / jnp.sqrt(dim)),
        "bk": jax.random.normal(kbk, (1, dim), jnp.float32) * 0.01,
        "gk": jnp.ones((1, dim), jnp.float32),
        "betak": jnp.zeros((1, dim), jnp.float32),
    }

    # Gumbel noise precomputed host-side for determinism: g = -log(-log(U)).
    u = jax.random.uniform(kg, (bs, topk, n_select), jnp.float32, minval=1e-10, maxval=1.0)
    gumbel = -jnp.log(-jnp.log(u))

    # TODO(synk): the non-'gumbel' (argmax/topk index) selection branch and the
    # torch NaN/inf debugger check are not kernelized; only the default gumbel path is.

    # ---- f32 V path (matches original module dtype) ----
    out = selector_forward(Q, K, V, params, gumbel, topk=topk, tau=tau, btile=8)
    out = jax.block_until_ready(out)
    ref = selector_reference(Q, K, V, params, gumbel, topk=topk, tau=tau)
    assert out.shape == (bs, topk * nf, obj_num, obj_dim)
    assert jnp.max(jnp.abs(out - ref)) < 1e-3, "mismatch vs reference (f32 V)"

    # ---- bf16 V path (halves dominant HBM traffic; MXU bf16 operands, f32 accumulate) ----
    Vb = V.astype(jnp.bfloat16)
    out_b = jax.block_until_ready(
        selector_forward(Q, K, Vb, params, gumbel, topk=topk, tau=tau, btile=8))
    ref_b = selector_reference(Q, K, Vb, params, gumbel, topk=topk, tau=tau)
    assert jnp.max(jnp.abs(out_b - ref_b)) < 5e-2, "mismatch vs reference (bf16 V)"

    print("KERNEL_OK")
</pallas_src>

<mosaic_0001>
module attributes {stable_mosaic.version = 11 : i64} {
  func.func @kernel(%arg0: i32, %arg1: memref<8x128xf32, #tpu.memory_space<vmem>>, %arg2: memref<64x128xf32, #tpu.memory_space<vmem>>, %arg3: memref<8x8x128xf32, #tpu.memory_space<vmem>>, %arg4: memref<8x2x8xf32, #tpu.memory_space<vmem>>, %arg5: memref<128x128xf32, #tpu.memory_space<vmem>>, %arg6: memref<1x128xf32, #tpu.memory_space<vmem>>, %arg7: memref<1x128xf32, #tpu.memory_space<vmem>>, %arg8: memref<1x128xf32, #tpu.memory_space<vmem>>, %arg9: memref<128x128xf32, #tpu.memory_space<vmem>>, %arg10: memref<1x128xf32, #tpu.memory_space<vmem>>, %arg11: memref<1x128xf32, #tpu.memory_space<vmem>>, %arg12: memref<1x128xf32, #tpu.memory_space<vmem>>, %arg13: memref<8x256xf32, #tpu.memory_space<vmem>>) attributes {dimension_semantics = [#tpu.dimension_semantics<parallel>], iteration_bounds = array<i64: 2>, scalar_prefetch = 0 : i64, scratch_operands = 0 : i64, tpu.core_type = #tpu.core_type<tc>, window_params = [{transform_indices = @transform_0, window_bounds = array<i64: 8, 128>}, {transform_indices = @transform_1, window_bounds = array<i64: 64, 128>}, {transform_indices = @transform_2, window_bounds = array<i64: 8, 8, 128>}, {transform_indices = @transform_3, window_bounds = array<i64: 8, 2, 8>}, {pipeline_mode = #tpu.pipeline_mode<synchronous>, transform_indices = @transform_4, window_bounds = array<i64: 128, 128>}, {pipeline_mode = #tpu.pipeline_mode<synchronous>, transform_indices = @transform_5, window_bounds = array<i64: 1, 128>}, {pipeline_mode = #tpu.pipeline_mode<synchronous>, transform_indices = @transform_6, window_bounds = array<i64: 1, 128>}, {pipeline_mode = #tpu.pipeline_mode<synchronous>, transform_indices = @transform_7, window_bounds = array<i64: 1, 128>}, {pipeline_mode = #tpu.pipeline_mode<synchronous>, transform_indices = @transform_8, window_bounds = array<i64: 128, 128>}, {pipeline_mode = #tpu.pipeline_mode<synchronous>, transform_indices = @transform_9, window_bounds = array<i64: 1, 128>}, {pipeline_mode = #tpu.pipeline_mode<synchronous>, transform_indices = @transform_10, window_bounds = array<i64: 1, 128>}, {pipeline_mode = #tpu.pipeline_mode<synchronous>, transform_indices = @transform_11, window_bounds = array<i64: 1, 128>}, {transform_indices = @transform_12, window_bounds = array<i64: 8, 256>}]} {
    %c0 = arith.constant 0 : index
    %c0_0 = arith.constant 0 : index
    %0 = vector.load %arg1[%c0, %c0_0] : memref<8x128xf32, #tpu.memory_space<vmem>>, vector<8x128xf32>
    %c0_1 = arith.constant 0 : index
    %c0_2 = arith.constant 0 : index
    %1 = vector.load %arg5[%c0_1, %c0_2] : memref<128x128xf32, #tpu.memory_space<vmem>>, vector<128x128xf32>
    %cst = arith.constant dense<0.000000e+00> : vector<8x128xf32>
    %2 = tpu.matmul %0, %1, %cst {dimension_numbers = #tpu.dot_dimension_numbers<[1], [0], [0], [1], [0, 0, 1, 1], [], []>} : vector<8x128xf32>, vector<128x128xf32>, vector<8x128xf32> -> vector<8x128xf32>
    %c0_3 = arith.constant 0 : index
    %c0_4 = arith.constant 0 : index
    %3 = vector.load %arg6[%c0_3, %c0_4] : memref<1x128xf32, #tpu.memory_space<vmem>>, vector<1x128xf32>
    %4 = vector.broadcast %3 : vector<1x128xf32> to vector<8x128xf32>
    %5 = arith.addf %2, %4 : vector<8x128xf32>
    %c0_5 = arith.constant 0 : index
    %c0_6 = arith.constant 0 : index
    %6 = vector.load %arg7[%c0_5, %c0_6] : memref<1x128xf32, #tpu.memory_space<vmem>>, vector<1x128xf32>
    %c0_7 = arith.constant 0 : index
    %c0_8 = arith.constant 0 : index
    %7 = vector.load %arg8[%c0_7, %c0_8] : memref<1x128xf32, #tpu.memory_space<vmem>>, vector<1x128xf32>
    %cst_9 = arith.constant dense<0.000000e+00> : vector<8xf32>
    %8 = vector.multi_reduction <add>, %5, %cst_9 [1] : vector<8x128xf32> to vector<8xf32>
    %9 = vector.shape_cast %8 : vector<8xf32> to vector<8x1xf32>
    %cst_10 = arith.constant 1.280000e+02 : f32
    %10 = vector.broadcast %cst_10 : f32 to vector<8x1xf32>
    %11 = arith.divf %9, %10 : vector<8x1xf32>
    %12 = vector.broadcast %11 : vector<8x1xf32> to vector<8x128xf32>
    %13 = arith.subf %5, %12 : vector<8x128xf32>
    %14 = arith.mulf %13, %13 : vector<8x128xf32>
    %cst_11 = arith.constant dense<0.000000e+00> : vector<8xf32>
    %15 = vector.multi_reduction <add>, %14, %cst_11 [1] : vector<8x128xf32> to vector<8xf32>
    %16 = vector.shape_cast %15 : vector<8xf32> to vector<8x1xf32>
    %cst_12 = arith.constant 1.280000e+02 : f32
    %17 = vector.broadcast %cst_12 : f32 to vector<8x1xf32>
    %18 = arith.divf %16, %17 : vector<8x1xf32>
    %19 = vector.broadcast %11 : vector<8x1xf32> to vector<8x128xf32>
    %20 = arith.subf %5, %19 : vector<8x128xf32>
    %cst_13 = arith.constant 9.99999996E-13 : f32
    %21 = vector.broadcast %cst_13 : f32 to vector<8x1xf32>
    %22 = arith.addf %18, %21 : vector<8x1xf32>
    %23 = math.rsqrt %22 : vector<8x1xf32>
    %24 = vector.broadcast %23 : vector<8x1xf32> to vector<8x128xf32>
    %25 = arith.mulf %20, %24 : vector<8x128xf32>
    %26 = vector.broadcast %6 : vector<1x128xf32> to vector<8x128xf32>
    %27 = arith.mulf %25, %26 : vector<8x128xf32>
    %28 = vector.broadcast %7 : vector<1x128xf32> to vector<8x128xf32>
    %29 = arith.addf %27, %28 : vector<8x128xf32>
    %c0_14 = arith.constant 0 : index
    %c0_15 = arith.constant 0 : index
    %30 = vector.load %arg2[%c0_14, %c0_15] : memref<64x128xf32, #tpu.memory_space<vmem>>, vector<64x128xf32>
    %c0_16 = arith.constant 0 : index
    %c0_17 = arith.constant 0 : index
    %31 = vector.load %arg9[%c0_16, %c0_17] : memref<128x128xf32, #tpu.memory_space<vmem>>, vector<128x128xf32>
    %cst_18 = arith.constant dense<0.000000e+00> : vector<64x128xf32>
    %32 = tpu.matmul %30, %31, %cst_18 {dimension_numbers = #tpu.dot_dimension_numbers<[1], [0], [0], [1], [0, 0, 1, 1], [], []>} : vector<64x128xf32>, vector<128x128xf32>, vector<64x128xf32> -> vector<64x128xf32>
    %c0_19 = arith.constant 0 : index
    %c0_20 = arith.constant 0 : index
    %33 = vector.load %arg10[%c0_19, %c0_20] : memref<1x128xf32, #tpu.memory_space<vmem>>, vector<1x128xf32>
    %34 = vector.broadcast %33 : vector<1x128xf32> to vector<64x128xf32>
    %35 = arith.addf %32, %34 : vector<64x128xf32>
    %c0_21 = arith.constant 0 : index
    %c0_22 = arith.constant 0 : index
    %36 = vector.load %arg11[%c0_21, %c0_22] : memref<1x128xf32, #tpu.memory_space<vmem>>, vector<1x128xf32>
    %c0_23 = arith.constant 0 : index
    %c0_24 = arith.constant 0 : index
    %37 = vector.load %arg12[%c0_23, %c0_24] : memref<1x128xf32, #tpu.memory_space<vmem>>, vector<1x128xf32>
    %cst_25 = arith.constant dense<0.000000e+00> : vector<64xf32>
    %38 = vector.multi_reduction <add>, %35, %cst_25 [1] : vector<64x128xf32> to vector<64xf32>
    %39 = vector.shape_cast %38 : vector<64xf32> to vector<64x1xf32>
    %cst_26 = arith.constant 1.280000e+02 : f32
    %40 = vector.broadcast %cst_26 : f32 to vector<64x1xf32>
    %41 = arith.divf %39, %40 : vector<64x1xf32>
    %42 = vector.broadcast %41 : vector<64x1xf32> to vector<64x128xf32>
    %43 = arith.subf %35, %42 : vector<64x128xf32>
    %44 = arith.mulf %43, %43 : vector<64x128xf32>
    %cst_27 = arith.constant dense<0.000000e+00> : vector<64xf32>
    %45 = vector.multi_reduction <add>, %44, %cst_27 [1] : vector<64x128xf32> to vector<64xf32>
    %46 = vector.shape_cast %45 : vector<64xf32> to vector<64x1xf32>
    %cst_28 = arith.constant 1.280000e+02 : f32
    %47 = vector.broadcast %cst_28 : f32 to vector<64x1xf32>
    %48 = arith.divf %46, %47 : vector<64x1xf32>
    %49 = vector.broadcast %41 : vector<64x1xf32> to vector<64x128xf32>
    %50 = arith.subf %35, %49 : vector<64x128xf32>
    %cst_29 = arith.constant 9.99999996E-13 : f32
    %51 = vector.broadcast %cst_29 : f32 to vector<64x1xf32>
    %52 = arith.addf %48, %51 : vector<64x1xf32>
    %53 = math.rsqrt %52 : vector<64x1xf32>
    %54 = vector.broadcast %53 : vector<64x1xf32> to vector<64x128xf32>
    %55 = arith.mulf %50, %54 : vector<64x128xf32>
    %56 = vector.broadcast %36 : vector<1x128xf32> to vector<64x128xf32>
    %57 = arith.mulf %55, %56 : vector<64x128xf32>
    %58 = vector.broadcast %37 : vector<1x128xf32> to vector<64x128xf32>
    %59 = arith.addf %57, %58 : vector<64x128xf32>
    %60 = vector.shape_cast %59 : vector<64x128xf32> to vector<8x8x128xf32>
    %61 = vector.shape_cast %29 : vector<8x128xf32> to vector<8x1x128xf32>
    %62 = vector.broadcast %61 : vector<8x1x128xf32> to vector<8x8x128xf32>
    %63 = arith.mulf %60, %62 : vector<8x8x128xf32>
    %cst_30 = arith.constant dense<0.000000e+00> : vector<8x8xf32>
    %64 = vector.multi_reduction <add>, %63, %cst_30 [2] : vector<8x8x128xf32> to vector<8x8xf32>
    %cst_31 = arith.constant dense<0xFF800000> : vector<8xf32>
    %65 = vector.multi_reduction <maximumf>, %64, %cst_31 [1] : vector<8x8xf32> to vector<8xf32>
    %66 = vector.shape_cast %65 : vector<8xf32> to vector<8x1xf32>
    %67 = vector.broadcast %66 : vector<8x1xf32> to vector<8x8xf32>
    %68 = arith.subf %64, %67 : vector<8x8xf32>
    %69 = math.exp %68 : vector<8x8xf32>
    %cst_32 = arith.constant dense<0.000000e+00> : vector<8xf32>
    %70 = vector.multi_reduction <add>, %69, %cst_32 [1] : vector<8x8xf32> to vector<8xf32>
    %71 = vector.shape_cast %70 : vector<8xf32> to vector<8x1xf32>
    %72 = vector.broadcast %71 : vector<8x1xf32> to vector<8x8xf32>
    %73 = arith.divf %69, %72 : vector<8x8xf32>
    %74 = vector.shape_cast %73 : vector<8x8xf32> to vector<8x1x8xf32>
    %c0_33 = arith.constant 0 : index
    %c0_34 = arith.constant 0 : index
    %c0_35 = arith.constant 0 : index
    %75 = vector.load %arg4[%c0_33, %c0_34, %c0_35] : memref<8x2x8xf32, #tpu.memory_space<vmem>>, vector<8x2x8xf32>
    %76 = vector.broadcast %74 : vector<8x1x8xf32> to vector<8x2x8xf32>
    %77 = arith.addf %76, %75 : vector<8x2x8xf32>
    %cst_36 = arith.constant 1.000000e+00 : f32
    %78 = vector.broadcast %cst_36 : f32 to vector<8x2x8xf32>
    %79 = arith.mulf %77, %78 : vector<8x2x8xf32>
    %cst_37 = arith.constant dense<0xFF800000> : vector<8x2xf32>
    %80 = vector.multi_reduction <maximumf>, %79, %cst_37 [2] : vector<8x2x8xf32> to vector<8x2xf32>
    %81 = vector.shape_cast %80 : vector<8x2xf32> to vector<8x2x1xf32>
    %82 = vector.broadcast %81 : vector<8x2x1xf32> to vector<8x2x8xf32>
    %83 = arith.subf %79, %82 : vector<8x2x8xf32>
    %84 = math.exp %83 : vector<8x2x8xf32>
    %cst_38 = arith.constant dense<0.000000e+00> : vector<8x2xf32>
    %85 = vector.multi_reduction <add>, %84, %cst_38 [2] : vector<8x2x8xf32> to vector<8x2xf32>
    %86 = vector.shape_cast %85 : vector<8x2xf32> to vector<8x2x1xf32>
    %87 = vector.broadcast %86 : vector<8x2x1xf32> to vector<8x2x8xf32>
    %88 = arith.divf %84, %87 : vector<8x2x8xf32>
    %c0_39 = arith.constant 0 : index
    %c0_40 = arith.constant 0 : index
    %c0_41 = arith.constant 0 : index
    %89 = vector.load %arg3[%c0_39, %c0_40, %c0_41] : memref<8x8x128xf32, #tpu.memory_space<vmem>>, vector<8x8x128xf32>
    "tpu.trace_start"() <{level = 10 : i32, message = "btn,bnf->btf"}> : () -> ()
    %cst_42 = arith.constant dense<0.000000e+00> : vector<8x2x128xf32>
    %90 = tpu.matmul %88, %89, %cst_42 {dimension_numbers = #tpu.dot_dimension_numbers<[2], [1], [1], [2], [0, 0, 0, 1, 1, 2], [0], [0]>} : vector<8x2x8xf32>, vector<8x8x128xf32>, vector<8x2x128xf32> -> vector<8x2x128xf32>
    "tpu.trace_stop"() : () -> ()
    %91 = vector.shape_cast %90 : vector<8x2x128xf32> to vector<8x256xf32>
    %c0_43 = arith.constant 0 : index
    %c0_44 = arith.constant 0 : index
    %92 = vector.load %arg13[%c0_43, %c0_44] : memref<8x256xf32, #tpu.memory_space<vmem>>, vector<8x256xf32>
    tpu.vector_store %arg13[%c0_43, %c0_44], %91 {strides = array<i32>} : memref<8x256xf32, #tpu.memory_space<vmem>>, vector<8x256xf32>,
    return
  }
  func.func @transform_0(%arg0: i32) -> (i32, i32) {
    %c0_i32 = arith.constant 0 : i32
    %c0_i32_0 = arith.constant 0 : i32
    return %arg0, %c0_i32 : i32, i32
  }
  func.func @transform_1(%arg0: i32) -> (i32, i32) {
    %c0_i32 = arith.constant 0 : i32
    %c0_i32_0 = arith.constant 0 : i32
    return %arg0, %c0_i32 : i32, i32
  }
  func.func @transform_2(%arg0: i32) -> (i32, i32, i32) {
    %c0_i32 = arith.constant 0 : i32
    %c0_i32_0 = arith.constant 0 : i32
    %c0_i32_1 = arith.constant 0 : i32
    return %arg0, %c0_i32, %c0_i32_0 : i32, i32, i32
  }
  func.func @transform_3(%arg0: i32) -> (i32, i32, i32) {
    %c0_i32 = arith.constant 0 : i32
    %c0_i32_0 = arith.constant 0 : i32
    %c0_i32_1 = arith.constant 0 : i32
    return %arg0, %c0_i32, %c0_i32_0 : i32, i32, i32
  }
  func.func @transform_4(%arg0: i32) -> (i32, i32) {
    %c0_i32 = arith.constant 0 : i32
    %c0_i32_0 = arith.constant 0 : i32
    %c0_i32_1 = arith.constant 0 : i32
    return %c0_i32, %c0_i32_0 : i32, i32
  }
  func.func @transform_5(%arg0: i32) -> (i32, i32) {
    %c0_i32 = arith.constant 0 : i32
    %c0_i32_0 = arith.constant 0 : i32
    %c0_i32_1 = arith.constant 0 : i32
    return %c0_i32, %c0_i32_0 : i32, i32
  }
  func.func @transform_6(%arg0: i32) -> (i32, i32) {
    %c0_i32 = arith.constant 0 : i32
    %c0_i32_0 = arith.constant 0 : i32
    %c0_i32_1 = arith.constant 0 : i32
    return %c0_i32, %c0_i32_0 : i32, i32
  }
  func.func @transform_7(%arg0: i32) -> (i32, i32) {
    %c0_i32 = arith.constant 0 : i32
    %c0_i32_0 = arith.constant 0 : i32
    %c0_i32_1 = arith.constant 0 : i32
    return %c0_i32, %c0_i32_0 : i32, i32
  }
  func.func @transform_8(%arg0: i32) -> (i32, i32) {
    %c0_i32 = arith.constant 0 : i32
    %c0_i32_0 = arith.constant 0 : i32
    %c0_i32_1 = arith.constant 0 : i32
    return %c0_i32, %c0_i32_0 : i32, i32
  }
  func.func @transform_9(%arg0: i32) -> (i32, i32) {
    %c0_i32 = arith.constant 0 : i32
    %c0_i32_0 = arith.constant 0 : i32
    %c0_i32_1 = arith.constant 0 : i32
    return %c0_i32, %c0_i32_0 : i32, i32
  }
  func.func @transform_10(%arg0: i32) -> (i32, i32) {
    %c0_i32 = arith.constant 0 : i32
    %c0_i32_0 = arith.constant 0 : i32
    %c0_i32_1 = arith.constant 0 : i32
    return %c0_i32, %c0_i32_0 : i32, i32
  }
  func.func @transform_11(%arg0: i32) -> (i32, i32) {
    %c0_i32 = arith.constant 0 : i32
    %c0_i32_0 = arith.constant 0 : i32
    %c0_i32_1 = arith.constant 0 : i32
    return %c0_i32, %c0_i32_0 : i32, i32
  }
  func.func @transform_12(%arg0: i32) -> (i32, i32) {
    %c0_i32 = arith.constant 0 : i32
    %c0_i32_0 = arith.constant 0 : i32
    return %arg0, %c0_i32 : i32, i32
  }
}

</mosaic_0001>

<llo_original>
// kernel: tpu_custom_call.1
$region0: #{tpu_custom_call.1}
  #allocation0 [shape = 'u32[]', space=smem, size = 0x4, offset = 0x4, fixed_abs, tag = 'smem constant byte address 0x4 - core index']
  #allocation1 [shape = 'u32[144,128]{1,0:T(1,128)}', space=vmem, size = 0x12000, scoped, tag = 'internal scratch']
  %s0 = inlined_call_operand.vmem [shape: f32[16,128], index: 0, kind: input, shape index: {}]
  %s1 = inlined_call_operand.hbm [shape: f32[128,128], index: 1, kind: input, shape index: {}]
  %s2 = inlined_call_operand.hbm [shape: f32[16,8,128], index: 2, kind: input, shape index: {}]
  %s3 = inlined_call_operand.vmem [shape: f32[16,2,8], index: 3, kind: input, shape index: {}]
  %s4 = inlined_call_operand.hbm [shape: f32[128,128], index: 4, kind: input, shape index: {}]
  %s5 = inlined_call_operand.vmem [shape: f32[1,128], index: 5, kind: input, shape index: {}]
  %s6 = inlined_call_operand.vmem [shape: f32[1,128], index: 6, kind: input, shape index: {}]
  %s7 = inlined_call_operand.vmem [shape: f32[1,128], index: 7, kind: input, shape index: {}]
  %s8 = inlined_call_operand.hbm [shape: f32[128,128], index: 8, kind: input, shape index: {}]
  %s9 = inlined_call_operand.vmem [shape: f32[1,128], index: 9, kind: input, shape index: {}]
  %s10 = inlined_call_operand.vmem [shape: f32[1,128], index: 10, kind: input, shape index: {}]
  %s11 = inlined_call_operand.vmem [shape: f32[1,128], index: 11, kind: input, shape index: {}]
  %s12 = inlined_call_operand.hbm [shape: f32[16,256], index: 12, kind: output, shape index: {}]
  %s13 = sld [smem:[#allocation0]]
  $region97: #{tpu_custom_call.1} parent=0
    _
  %s15 = ssub.s32 1, %s13
  %s16 = scalar_select 0, %s15, %s13
  $region1: #{tpu_custom_call.1} parent=0
    #allocation2 [shape = 'u8[65536]{0}', space=vmem, size = 0x10000, scoped, tag = 'input window, operand 1']
    #allocation3 [shape = 's32[2]{0}', space=sflag, size = 0x8, scoped, tag = 'scoped memory for tpu_custom_call.1']
    #allocation4 [shape = 's32[2]{0}', space=sflag, size = 0x8, scoped, tag = 'scoped memory for tpu_custom_call.1']
    #allocation5 [shape = 'u8[65536]{0}', space=vmem, size = 0x10000, scoped, tag = 'input window, operand 2']
    #allocation6 [shape = 's32[2]{0}', space=sflag, size = 0x8, scoped, tag = 'scoped memory for tpu_custom_call.1']
    #allocation7 [shape = 'u8[65536]{0}', space=vmem, size = 0x10000, scoped, tag = 'input window, operand 4, single buffered']
    #allocation8 [shape = 'u8[65536]{0}', space=vmem, size = 0x10000, scoped, tag = 'input window, operand 8, single buffered']
    #allocation9 [shape = 's32[1]{0}', space=sflag, size = 0x4, scoped, tag = 'scoped memory for tpu_custom_call.1']
    #allocation10 [shape = 'u8[16384]{0}', space=vmem, size = 0x4000, scoped, tag = 'output window, operand 0']
    %17 = vsyncpa [#allocation3], 0
    %s18 = scalar_lea.sflag [#allocation3], 1
    %19 = vsyncpa %s18, 0
    %20 = vsyncpa [#allocation6], 0
    %s21 = scalar_lea.sflag [#allocation6], 1
    %22 = vsyncpa %s21, 0
    %23 = vsyncpa [#allocation9], 0
    %24 = vsyncpa [#allocation4], 0
    %s25 = scalar_lea.sflag [#allocation4], 1
    %26 = vsyncpa %s25, 0
    loop: start=0, step=1, limit=4
    $region2: #{tpu_custom_call.1} parent=1 // loop_pre_header
      _
    $region3: #{tpu_custom_call.1} parent=1 // loop_header
      %s28 = sphi 0, %s32
      %p29 = scmp.ge.s32.totalorder %s28, 4
      %s38 = sphi 0, %s40
      %s41 = sphi 0, %s38
      %s42 = sphi 0, %s41
      %s58 = sphi 0, %s42
      %s64 = sphi 0, %s66
      %s67 = sphi 0, %s64
      %s68 = sphi 0, %s67
      %s84 = sphi 0, %s68
      %s90 = sphi 0, %s92
      %s93 = sphi 0, %s90
      %s94 = sphi 0, %s93
      %s110 = sphi 0, %s94
      %s116 = sphi 0, %s118
      %s119 = sphi 0, %s116
      %s120 = sphi 0, %s119
      %s136 = sphi 0, %s120
      %s140 = sphi 0, %s140
      %s142 = sphi 0, %s140
      %s143 = sphi 0, %s142
      %s157 = sphi 0, %s143
      %s161 = sphi 0, %s161
      %s163 = sphi 0, %s161
      %s164 = sphi 0, %s163
      %s178 = sphi 0, %s164
      %s182 = sphi 0, %s182
      %s184 = sphi 0, %s182
      %s185 = sphi 0, %s184
      %s199 = sphi 0, %s185
      %s203 = sphi 0, %s203
      %s205 = sphi 0, %s203
      %s206 = sphi 0, %s205
      %s220 = sphi 0, %s206
      %s224 = sphi 0, %s224
      %s226 = sphi 0, %s224
      %s227 = sphi 0, %s226
      %s241 = sphi 0, %s227
      %s245 = sphi 0, %s245
      %s247 = sphi 0, %s245
      %s248 = sphi 0, %s247
      %s262 = sphi 0, %s248
      %s266 = sphi 0, %s266
      %s268 = sphi 0, %s266
      %s269 = sphi 0, %s268
      %s283 = sphi 0, %s269
      %s287 = sphi 0, %s287
      %s289 = sphi 0, %s287
      %s290 = sphi 0, %s289
      %s304 = sphi 0, %s290
      %s310 = sphi 0, %s312
      %s313 = sphi 0, %s310
      %s314 = sphi 0, %s313
      %s330 = sphi 0, %s314
    $region4: #{tpu_custom_call.1} parent=1 // loop_header_branch
      %31 = sbr.rel (%p29) target = $region8
    $region5: #{tpu_custom_call.1} parent=1 // loop_body
      %s33 = ssub.s32 %s28, 1
      %s34 = ssub.s32 %s28, 2
      %s35 = sadd.s32 %s28, 1
      %s36 = ssub.s32 %s28, %s35
      %p37 = scmp.eq.s32.totalorder %s36, 0
      %s39 = sadd.s32 %s38, 1
      %s40 = scalar_select %p37, %s38, %s39
      %p43 = pneg %p37
      %p44 = scmp.eq.s32.totalorder %s28, 1
      %p45 = por %p43, %p44
      %p46 = scmp.ne.s32.totalorder %s38, %s41
      %p47 = scmp.eq.s32.totalorder %s28, 0
      %p48 = por %p46, %p47
      %p49 = scmp.ne.s32.totalorder %s38, %s41
      %p50 = scmp.eq.s32.totalorder %s33, 1
      %p51 = por %p49, %p50
      %p52 = scmp.ne.s32.totalorder %s41, %s42
      %p53 = scmp.eq.s32.totalorder %s33, 0
      %p54 = por %p52, %p53
      %p55 = scmp.ne.s32.totalorder %s41, %s42
      %p56 = scmp.eq.s32.totalorder %s34, 1
      %p57 = por %p55, %p56
      %p59 = scmp.ne.s32.totalorder %s42, %s58
      %p60 = scmp.eq.s32.totalorder %s34, 0
      %p61 = por %p59, %p60
      %s62 = ssub.s32 %s28, %s35
      %p63 = scmp.eq.s32.totalorder %s62, 0
      %s65 = sadd.s32 %s64, 1
      %s66 = scalar_select %p63, %s64, %s65
      %p69 = pneg %p63
      %p70 = scmp.eq.s32.totalorder %s28, 1
      %p71 = por %p69, %p70
      %p72 = scmp.ne.s32.totalorder %s64, %s67
      %p73 = scmp.eq.s32.totalorder %s28, 0
      %p74 = por %p72, %p73
      %p75 = scmp.ne.s32.totalorder %s64, %s67
      %p76 = scmp.eq.s32.totalorder %s33, 1
      %p77 = por %p75, %p76
      %p78 = scmp.ne.s32.totalorder %s67, %s68
      %p79 = scmp.eq.s32.totalorder %s33, 0
      %p80 = por %p78, %p79
      %p81 = scmp.ne.s32.totalorder %s67, %s68
      %p82 = scmp.eq.s32.totalorder %s34, 1
      %p83 = por %p81, %p82
      %p85 = scmp.ne.s32.totalorder %s68, %s84
      %p86 = scmp.eq.s32.totalorder %s34, 0
      %p87 = por %p85, %p86
      %s88 = ssub.s32 %s28, %s35
      %p89 = scmp.eq.s32.totalorder %s88, 0
      %s91 = sadd.s32 %s90, 1
      %s92 = scalar_select %p89, %s90, %s91
      %p95 = pneg %p89
      %p96 = scmp.eq.s32.totalorder %s28, 1
      %p97 = por %p95, %p96
      %p98 = scmp.ne.s32.totalorder %s90, %s93
      %p99 = scmp.eq.s32.totalorder %s28, 0
      %p100 = por %p98, %p99
      %p101 = scmp.ne.s32.totalorder %s90, %s93
      %p102 = scmp.eq.s32.totalorder %s33, 1
      %p103 = por %p101, %p102
      %p104 = scmp.ne.s32.totalorder %s93, %s94
      %p105 = scmp.eq.s32.totalorder %s33, 0
      %p106 = por %p104, %p105
      %p107 = scmp.ne.s32.totalorder %s93, %s94
      %p108 = scmp.eq.s32.totalorder %s34, 1
      %p109 = por %p107, %p108
      %p111 = scmp.ne.s32.totalorder %s94, %s110
      %p112 = scmp.eq.s32.totalorder %s34, 0
      %p113 = por %p111, %p112
      %s114 = ssub.s32 %s28, %s35
      %p115 = scmp.eq.s32.totalorder %s114, 0
      %s117 = sadd.s32 %s116, 1
      %s118 = scalar_select %p115, %s116, %s117
      %p121 = pneg %p115
      %p122 = scmp.eq.s32.totalorder %s28, 1
      %p123 = por %p121, %p122
      %p124 = scmp.ne.s32.totalorder %s116, %s119
      %p125 = scmp.eq.s32.totalorder %s28, 0
      %p126 = por %p124, %p125
      %p127 = scmp.ne.s32.totalorder %s116, %s119
      %p128 = scmp.eq.s32.totalorder %s33, 1
      %p129 = por %p127, %p128
      %p130 = scmp.ne.s32.totalorder %s119, %s120
      %p131 = scmp.eq.s32.totalorder %s33, 0
      %p132 = por %p130, %p131
      %p133 = scmp.ne.s32.totalorder %s119, %s120
      %p134 = scmp.eq.s32.totalorder %s34, 1
      %p135 = por %p133, %p134
      %p137 = scmp.ne.s32.totalorder %s120, %s136
      %p138 = scmp.eq.s32.totalorder %s34, 0
      %p139 = por %p137, %p138
      %s141 = sadd.s32 %s140, 1
      %p144 = scmp.eq.s32.totalorder %s28, 1
      %p145 = scmp.ne.s32.totalorder %s140, %s142
      %p146 = scmp.eq.s32.totalorder %s28, 0
      %p147 = por %p145, %p146
      %p148 = scmp.ne.s32.totalorder %s140, %s142
      %p149 = scmp.eq.s32.totalorder %s33, 1
      %p150 = por %p148, %p149
      %p151 = scmp.ne.s32.totalorder %s142, %s143
      %p152 = scmp.eq.s32.totalorder %s33, 0
      %p153 = por %p151, %p152
      %p154 = scmp.ne.s32.totalorder %s142, %s143
      %p155 = scmp.eq.s32.totalorder %s34, 1
      %p156 = por %p154, %p155
      %p158 = scmp.ne.s32.totalorder %s143, %s157
      %p159 = scmp.eq.s32.totalorder %s34, 0
      %p160 = por %p158, %p159
      %s162 = sadd.s32 %s161, 1
      %p165 = scmp.eq.s32.totalorder %s28, 1
      %p166 = scmp.ne.s32.totalorder %s161, %s163
      %p167 = scmp.eq.s32.totalorder %s28, 0
      %p168 = por %p166, %p167
      %p169 = scmp.ne.s32.totalorder %s161, %s163
      %p170 = scmp.eq.s32.totalorder %s33, 1
      %p171 = por %p169, %p170
      %p172 = scmp.ne.s32.totalorder %s163, %s164
      %p173 = scmp.eq.s32.totalorder %s33, 0
      %p174 = por %p172, %p173
      %p175 = scmp.ne.s32.totalorder %s163, %s164
      %p176 = scmp.eq.s32.totalorder %s34, 1
      %p177 = por %p175, %p176
      %p179 = scmp.ne.s32.totalorder %s164, %s178
      %p180 = scmp.eq.s32.totalorder %s34, 0
      %p181 = por %p179, %p180
      %s183 = sadd.s32 %s182, 1
      %p186 = scmp.eq.s32.totalorder %s28, 1
      %p187 = scmp.ne.s32.totalorder %s182, %s184
      %p188 = scmp.eq.s32.totalorder %s28, 0
      %p189 = por %p187, %p188
      %p190 = scmp.ne.s32.totalorder %s182, %s184
      %p191 = scmp.eq.s32.totalorder %s33, 1
      %p192 = por %p190, %p191
      %p193 = scmp.ne.s32.totalorder %s184, %s185
      %p194 = scmp.eq.s32.totalorder %s33, 0
      %p195 = por %p193, %p194
      %p196 = scmp.ne.s32.totalorder %s184, %s185
      %p197 = scmp.eq.s32.totalorder %s34, 1
      %p198 = por %p196, %p197
      %p200 = scmp.ne.s32.totalorder %s185, %s199
      %p201 = scmp.eq.s32.totalorder %s34, 0
      %p202 = por %p200, %p201
      %s204 = sadd.s32 %s203, 1
      %p207 = scmp.eq.s32.totalorder %s28, 1
      %p208 = scmp.ne.s32.totalorder %s203, %s205
      %p209 = scmp.eq.s32.totalorder %s28, 0
      %p210 = por %p208, %p209
      %p211 = scmp.ne.s32.totalorder %s203, %s205
      %p212 = scmp.eq.s32.totalorder %s33, 1
      %p213 = por %p211, %p212
      %p214 = scmp.ne.s32.totalorder %s205, %s206
      %p215 = scmp.eq.s32.totalorder %s33, 0
      %p216 = por %p214, %p215
      %p217 = scmp.ne.s32.totalorder %s205, %s206
      %p218 = scmp.eq.s32.totalorder %s34, 1
      %p219 = por %p217, %p218
      %p221 = scmp.ne.s32.totalorder %s206, %s220
      %p222 = scmp.eq.s32.totalorder %s34, 0
      %p223 = por %p221, %p222
      %s225 = sadd.s32 %s224, 1
      %p228 = scmp.eq.s32.totalorder %s28, 1
      %p229 = scmp.ne.s32.totalorder %s224, %s226
      %p230 = scmp.eq.s32.totalorder %s28, 0
      %p231 = por %p229, %p230
      %p232 = scmp.ne.s32.totalorder %s224, %s226
      %p233 = scmp.eq.s32.totalorder %s33, 1
      %p234 = por %p232, %p233
      %p235 = scmp.ne.s32.totalorder %s226, %s227
      %p236 = scmp.eq.s32.totalorder %s33, 0
      %p237 = por %p235, %p236
      %p238 = scmp.ne.s32.totalorder %s226, %s227
      %p239 = scmp.eq.s32.totalorder %s34, 1
      %p240 = por %p238, %p239
      %p242 = scmp.ne.s32.totalorder %s227, %s241
      %p243 = scmp.eq.s32.totalorder %s34, 0
      %p244 = por %p242, %p243
      %s246 = sadd.s32 %s245, 1
      %p249 = scmp.eq.s32.totalorder %s28, 1
      %p250 = scmp.ne.s32.totalorder %s245, %s247
      %p251 = scmp.eq.s32.totalorder %s28, 0
      %p252 = por %p250, %p251
      %p253 = scmp.ne.s32.totalorder %s245, %s247
      %p254 = scmp.eq.s32.totalorder %s33, 1
      %p255 = por %p253, %p254
      %p256 = scmp.ne.s32.totalorder %s247, %s248
      %p257 = scmp.eq.s32.totalorder %s33, 0
      %p258 = por %p256, %p257
      %p259 = scmp.ne.s32.totalorder %s247, %s248
      %p260 = scmp.eq.s32.totalorder %s34, 1
      %p261 = por %p259, %p260
      %p263 = scmp.ne.s32.totalorder %s248, %s262
      %p264 = scmp.eq.s32.totalorder %s34, 0
      %p265 = por %p263, %p264
      %s267 = sadd.s32 %s266, 1
      %p270 = scmp.eq.s32.totalorder %s28, 1
      %p271 = scmp.ne.s32.totalorder %s266, %s268
      %p272 = scmp.eq.s32.totalorder %s28, 0
      %p273 = por %p271, %p272
      %p274 = scmp.ne.s32.totalorder %s266, %s268
      %p275 = scmp.eq.s32.totalorder %s33, 1
      %p276 = por %p274, %p275
      %p277 = scmp.ne.s32.totalorder %s268, %s269
      %p278 = scmp.eq.s32.totalorder %s33, 0
      %p279 = por %p277, %p278
      %p280 = scmp.ne.s32.totalorder %s268, %s269
      %p281 = scmp.eq.s32.totalorder %s34, 1
      %p282 = por %p280, %p281
      %p284 = scmp.ne.s32.totalorder %s269, %s283
      %p285 = scmp.eq.s32.totalorder %s34, 0
      %p286 = por %p284, %p285
      %s288 = sadd.s32 %s287, 1
      %p291 = scmp.eq.s32.totalorder %s28, 1
      %p292 = scmp.ne.s32.totalorder %s287, %s289
      %p293 = scmp.eq.s32.totalorder %s28, 0
      %p294 = por %p292, %p293
      %p295 = scmp.ne.s32.totalorder %s287, %s289
      %p296 = scmp.eq.s32.totalorder %s33, 1
      %p297 = por %p295, %p296
      %p298 = scmp.ne.s32.totalorder %s289, %s290
      %p299 = scmp.eq.s32.totalorder %s33, 0
      %p300 = por %p298, %p299
      %p301 = scmp.ne.s32.totalorder %s289, %s290
      %p302 = scmp.eq.s32.totalorder %s34, 1
      %p303 = por %p301, %p302
      %p305 = scmp.ne.s32.totalorder %s290, %s304
      %p306 = scmp.eq.s32.totalorder %s34, 0
      %p307 = por %p305, %p306
      %s308 = ssub.s32 %s28, %s35
      %p309 = scmp.eq.s32.totalorder %s308, 0
      %s311 = sadd.s32 %s310, 1
      %s312 = scalar_select %p309, %s310, %s311
      %p315 = pneg %p309
      %p316 = scmp.eq.s32.totalorder %s28, 1
      %p317 = por %p315, %p316
      %p318 = scmp.ne.s32.totalorder %s310, %s313
      %p319 = scmp.eq.s32.totalorder %s28, 0
      %p320 = por %p318, %p319
      %p321 = scmp.ne.s32.totalorder %s310, %s313
      %p322 = scmp.eq.s32.totalorder %s33, 1
      %p323 = por %p321, %p322
      %p324 = scmp.ne.s32.totalorder %s313, %s314
      %p325 = scmp.eq.s32.totalorder %s33, 0
      %p326 = por %p324, %p325
      %p327 = scmp.ne.s32.totalorder %s313, %s314
      %p328 = scmp.eq.s32.totalorder %s34, 1
      %p329 = por %p327, %p328
      %p331 = scmp.ne.s32.totalorder %s314, %s330
      %p332 = scmp.eq.s32.totalorder %s34, 0
      %p333 = por %p331, %p332
      %p334 = scmp.le.s32.totalorder 1, %s28
      %p335 = scmp.lt.s32.totalorder %s28, 3
      %p336 = pnand %p334, %p335
      %p337 = pneg %p336
      // Predicated region
      $region9: #{tpu_custom_call.1} parent=5 // pred_check
        _
      $region10: #{tpu_custom_call.1} parent=5 // pred_check_branch
        %339 = sbr.rel (%p336) target = $region12
      $region11: #{tpu_custom_call.1} parent=5 // pred_region
        %s340 = ssub.s32 %s28, 1
        // Predicated region
        $region13: #{tpu_custom_call.1} parent=11 // pred_check
          %p341 = pneg %p153
        $region14: #{tpu_custom_call.1} parent=11 // pred_check_branch
          %343 = sbr.rel (%p341) target = $region16
        $region15: #{tpu_custom_call.1} parent=11 // pred_region
          %s345 = ssub.s32 2048, 2048
          %346 = vsyncadd [#allocation6], %s345
          %s347 = sshll.u32 [#allocation7], 4
          %s348 = int_to_ptr.vmem [resolvable:$true] %s347
          %353 = dma.hbm_to_vmem [thread:$0]  %s4, 2048, %s348, [#allocation6], 128, 128, 8
        $region16: #{tpu_custom_call.1} parent=11 // pred_fallthru
          _
        // Predicated region
        $region17: #{tpu_custom_call.1} parent=11 // pred_check
          %p354 = pneg %p174
        $region18: #{tpu_custom_call.1} parent=11 // pred_check_branch
          %356 = sbr.rel (%p354) target = $region20
        $region19: #{tpu_custom_call.1} parent=11 // pred_region
          _
        $region20: #{tpu_custom_call.1} parent=11 // pred_fallthru
          _
        // Predicated region
        $region21: #{tpu_custom_call.1} parent=11 // pred_check
          %p357 = pneg %p195
        $region22: #{tpu_custom_call.1} parent=11 // pred_check_branch
          %359 = sbr.rel (%p357) target = $region24
        $region23: #{tpu_custom_call.1} parent=11 // pred_region
          _
        $region24: #{tpu_custom_call.1} parent=11 // pred_fallthru
          _
        // Predicated region
        $region25: #{tpu_custom_call.1} parent=11 // pred_check
          %p360 = pneg %p216
        $region26: #{tpu_custom_call.1} parent=11 // pred_check_branch
          %362 = sbr.rel (%p360) target = $region28
        $region27: #{tpu_custom_call.1} parent=11 // pred_region
          _
        $region28: #{tpu_custom_call.1} parent=11 // pred_fallthru
          _
        // Predicated region
        $region29: #{tpu_custom_call.1} parent=11 // pred_check
          %p363 = pneg %p237
        $region30: #{tpu_custom_call.1} parent=11 // pred_check_branch
          %365 = sbr.rel (%p363) target = $region32
        $region31: #{tpu_custom_call.1} parent=11 // pred_region
          %s367 = ssub.s32 2048, 2048
          %368 = vsyncadd [#allocation9], %s367
          %s369 = sshll.u32 [#allocation8], 4
          %s370 = int_to_ptr.vmem [resolvable:$true] %s369
          %375 = dma.hbm_to_vmem [thread:$0]  %s8, 2048, %s370, [#allocation9], 128, 128, 8
        $region32: #{tpu_custom_call.1} parent=11 // pred_fallthru
          _
        // Predicated region
        $region33: #{tpu_custom_call.1} parent=11 // pred_check
          %p376 = pneg %p258
        $region34: #{tpu_custom_call.1} parent=11 // pred_check_branch
          %378 = sbr.rel (%p376) target = $region36
        $region35: #{tpu_custom_call.1} parent=11 // pred_region
          _
        $region36: #{tpu_custom_call.1} parent=11 // pred_fallthru
          _
        // Predicated region
        $region37: #{tpu_custom_call.1} parent=11 // pred_check
          %p379 = pneg %p279
        $region38: #{tpu_custom_call.1} parent=11 // pred_check_branch
          %381 = sbr.rel (%p379) target = $region40
        $region39: #{tpu_custom_call.1} parent=11 // pred_region
          _
        $region40: #{tpu_custom_call.1} parent=11 // pred_fallthru
          _
        // Predicated region
        $region41: #{tpu_custom_call.1} parent=11 // pred_check
          %p382 = pneg %p300
        $region42: #{tpu_custom_call.1} parent=11 // pred_check_branch
          %384 = sbr.rel (%p382) target = $region44
        $region43: #{tpu_custom_call.1} parent=11 // pred_region
          _
        $region44: #{tpu_custom_call.1} parent=11 // pred_fallthru
          _
      $region12: #{tpu_custom_call.1} parent=5 // pred_fallthru
        _
      %p385 = scmp.lt.s32.totalorder %s28, 2
      // Predicated region
      $region45: #{tpu_custom_call.1} parent=5 // pred_check
        %p386 = pneg %p385
      $region46: #{tpu_custom_call.1} parent=5 // pred_check_branch
        %388 = sbr.rel (%p386) target = $region48
      $region47: #{tpu_custom_call.1} parent=5 // pred_region
        // Predicated region
        $region49: #{tpu_custom_call.1} parent=47 // pred_check
          %p389 = pneg %p48
        $region50: #{tpu_custom_call.1} parent=47 // pred_check_branch
          %391 = sbr.rel (%p389) target = $region52
        $region51: #{tpu_custom_call.1} parent=47 // pred_region
          %p392 = scmp.lt.s32.totalorder %s28, 1
          %s393 = scalar_select %p392, %s28, 1
          %s394 = smul.addr %s393, 8
          %s395 = scalar_lea.vmem %s0, %s394
        $region52: #{tpu_custom_call.1} parent=47 // pred_fallthru
          _
        // Predicated region
        $region53: #{tpu_custom_call.1} parent=47 // pred_check
          %p396 = pneg %p74
        $region54: #{tpu_custom_call.1} parent=47 // pred_check_branch
          %398 = sbr.rel (%p396) target = $region56
        $region55: #{tpu_custom_call.1} parent=47 // pred_region
          %s399 = sand.u32 %s64, 1
          %s400 = scalar_lea.sflag [#allocation3], %s399
          %s401 = sand.u32 %s64, 1
          %s402 = smul.addr %s401, 64
          %s403 = scalar_lea.vmem [#allocation2], %s402
          %s404 = smul.u32 8, %s28
          %s406 = ssub.s32 1024, 1024
          %407 = vsyncadd %s400, %s406
          %s408 = smul.addr %s404, 128
          %s409 = scalar_lea.hbm %s1, %s408
          %s410 = sshll.u32 %s403, 4
          %s411 = int_to_ptr.vmem [resolvable:$true] %s410
          %416 = dma.hbm_to_vmem [thread:$0]  %s409, 1024, %s411, %s400, 128, 128, 8
        $region56: #{tpu_custom_call.1} parent=47 // pred_fallthru
          _
        // Predicated region
        $region57: #{tpu_custom_call.1} parent=47 // pred_check
          %p417 = pneg %p100
        $region58: #{tpu_custom_call.1} parent=47 // pred_check_branch
          %419 = sbr.rel (%p417) target = $region60
        $region59: #{tpu_custom_call.1} parent=47 // pred_region
          %s420 = sand.u32 %s28, 1
          %s421 = scalar_lea.sflag [#allocation6], %s420
          %s422 = sand.u32 %s90, 1
          %s423 = smul.addr %s422, 64
          %s424 = scalar_lea.vmem [#allocation5], %s423
          %s425 = smul.u32 8, %s28
          %s427 = ssub.s32 1024, 1024
          %428 = vsyncadd %s421, %s427
          %s429 = smul.addr %s425, 128
          %s430 = scalar_lea.hbm %s2, %s429
          %s431 = sshll.u32 %s424, 4
          %s432 = int_to_ptr.vmem [resolvable:$true] %s431
          %437 = dma.hbm_to_vmem [thread:$0]  %s430, 1024, %s432, %s421, 128, 128, 8
        $region60: #{tpu_custom_call.1} parent=47 // pred_fallthru
          _
        // Predicated region
        $region61: #{tpu_custom_call.1} parent=47 // pred_check
          %p438 = pneg %p126
        $region62: #{tpu_custom_call.1} parent=47 // pred_check_branch
          %440 = sbr.rel (%p438) target = $region64
        $region63: #{tpu_custom_call.1} parent=47 // pred_region
          %s441 = smul.u32 8, %s28
          %p442 = scmp.lt.s32.totalorder %s441, 15
          %s443 = scalar_select %p442, %s441, 15
          %s444 = smul.addr %s443, 2
          %s445 = scalar_lea.vmem %s3, %s444
          %s446 = smul.u32 8, %s28
        $region64: #{tpu_custom_call.1} parent=47 // pred_fallthru
          _
      $region48: #{tpu_custom_call.1} parent=5 // pred_fallthru
        _
      %p447 = scmp.le.s32.totalorder 1, %s28
      %p448 = scmp.lt.s32.totalorder %s28, 3
      %p449 = pnand %p447, %p448
      %p450 = pneg %p449
      // Predicated region
      $region65: #{tpu_custom_call.1} parent=5 // pred_check
        _
      $region66: #{tpu_custom_call.1} parent=5 // pred_check_branch
        %452 = sbr.rel (%p449) target = $region68
      $region67: #{tpu_custom_call.1} parent=5 // pred_region
        %s453 = ssub.s32 %s28, 1
        %s454 = sand.u32 %s67, 1
        %s455 = scalar_lea.sflag [#allocation3], %s454
        %s456 = sand.u32 %s67, 1
        %s457 = smul.addr %s456, 64
        %s458 = scalar_lea.vmem [#allocation2], %s457
        // Predicated region
        $region69: #{tpu_custom_call.1} parent=67 // pred_check
          %p459 = pneg %p80
        $region70: #{tpu_custom_call.1} parent=67 // pred_check_branch
          %461 = sbr.rel (%p459) target = $region72
        $region71: #{tpu_custom_call.1} parent=67 // pred_region
          %462 = dma.done %s455, 1024
        $region72: #{tpu_custom_call.1} parent=67 // pred_fallthru
          _
        %s463 = sand.u32 %s33, 1
        %s464 = scalar_lea.sflag [#allocation6], %s463
        %s465 = sand.u32 %s93, 1
        %s466 = smul.addr %s465, 64
        %s467 = scalar_lea.vmem [#allocation5], %s466
        // Predicated region
        $region73: #{tpu_custom_call.1} parent=67 // pred_check
          %p468 = pneg %p106
        $region74: #{tpu_custom_call.1} parent=67 // pred_check_branch
          %470 = sbr.rel (%p468) target = $region76
        $region75: #{tpu_custom_call.1} parent=67 // pred_region
          %471 = dma.done %s464, 1024
        $region76: #{tpu_custom_call.1} parent=67 // pred_fallthru
          _
        // Predicated region
        $region77: #{tpu_custom_call.1} parent=67 // pred_check
          %p472 = pneg %p153
        $region78: #{tpu_custom_call.1} parent=67 // pred_check_branch
          %474 = sbr.rel (%p472) target = $region80
        $region79: #{tpu_custom_call.1} parent=67 // pred_region
          %475 = dma.done [#allocation6], 2048
        $region80: #{tpu_custom_call.1} parent=67 // pred_fallthru
          _
        // Predicated region
        $region81: #{tpu_custom_call.1} parent=67 // pred_check
          %p476 = pneg %p237
        $region82: #{tpu_custom_call.1} parent=67 // pred_check_branch
          %478 = sbr.rel (%p476) target = $region84
        $region83: #{tpu_custom_call.1} parent=67 // pred_region
          %479 = dma.done [#allocation9], 2048
        $region84: #{tpu_custom_call.1} parent=67 // pred_fallthru
          _
        %p480 = scmp.lt.s32.totalorder %s33, 1
        %s481 = scalar_select %p480, %s33, 1
        %s482 = smul.addr %s481, 8
        %s483 = scalar_lea.vmem %s0, %s482
        %p484 = pneg %p54
        %p485 = pneg %p51
        %s486 = sand.u32 %s67, 1
        %s487 = scalar_lea.sflag [#allocation3], %s486
        %s488 = sand.u32 %s67, 1
        %s489 = smul.addr %s488, 64
        %s490 = scalar_lea.vmem [#allocation2], %s489
        %p491 = pneg %p80
        %p492 = pneg %p77
        %s493 = sand.u32 %s33, 1
        %s494 = scalar_lea.sflag [#allocation6], %s493
        %s495 = sand.u32 %s93, 1
        %s496 = smul.addr %s495, 64
        %s497 = scalar_lea.vmem [#allocation5], %s496
        %p498 = pneg %p106
        %p499 = pneg %p103
        %s500 = smul.u32 8, %s33
        %p501 = scmp.lt.s32.totalorder %s500, 15
        %s502 = scalar_select %p501, %s500, 15
        %s503 = smul.addr %s502, 2
        %s504 = scalar_lea.vmem %s3, %s503
        %p505 = pneg %p132
        %p506 = pneg %p129
        %p507 = pneg %p153
        %p508 = pneg %p150
        %p509 = pneg %p174
        %p510 = pneg %p171
        %p511 = pneg %p195
        %p512 = pneg %p192
        %p513 = pneg %p216
        %p514 = pneg %p213
        %p515 = pneg %p237
        %p516 = pneg %p234
        %p517 = pneg %p258
        %p518 = pneg %p255
        %p519 = pneg %p279
        %p520 = pneg %p276
        %p521 = pneg %p300
        %p522 = pneg %p297
        %p523 = pneg %p326
        %p524 = pneg %p323
        %s525 = sand.u32 %s313, 1
        %s526 = scalar_lea.sflag [#allocation4], %s525
        %s527 = sand.u32 %s313, 1
        %s528 = smul.addr %s527, 16
        %s529 = scalar_lea.vmem [#allocation10], %s528
        %p530 = scmp.lt.s32.totalorder %s33, 1
        %s531 = scalar_select %p530, %s33, 1
        %s532 = smul.addr %s531, 8
        %s533 = scalar_lea.vmem %s0, %s532
        %s534 = smul.u32 8, %s33
        %s535 = smul.u32 8, %s33
        %s536 = smul.u32 8, %s33
        %p537 = scmp.lt.s32.totalorder %s536, 15
        %s538 = scalar_select %p537, %s536, 15
        %s539 = smul.addr %s538, 2
        %s540 = scalar_lea.vmem %s3, %s539
        %s541 = smul.u32 8, %s33
        %v542 = vld [vmem:[%s533] sm:$0xff]
        %v543 = vld [vmem:[#allocation7] sm:$0xff]
        %v544 = vld [vmem:[#allocation7 + $0x8] sm:$0xff]
        %v545 = vld [vmem:[#allocation7 + $0x10] sm:$0xff]
        %v546 = vld [vmem:[#allocation7 + $0x18] sm:$0xff]
        %v547 = vld [vmem:[#allocation7 + $0x20] sm:$0xff]
        %v548 = vld [vmem:[#allocation7 + $0x28] sm:$0xff]
        %v549 = vld [vmem:[#allocation7 + $0x30] sm:$0xff]
        %v550 = vld [vmem:[#allocation7 + $0x38] sm:$0xff]
        %v551 = vld [vmem:[#allocation7 + $0x40] sm:$0xff]
        %v552 = vld [vmem:[#allocation7 + $0x48] sm:$0xff]
        %v553 = vld [vmem:[#allocation7 + $0x50] sm:$0xff]
        %v554 = vld [vmem:[#allocation7 + $0x58] sm:$0xff]
        %v555 = vld [vmem:[#allocation7 + $0x60] sm:$0xff]
        %v556 = vld [vmem:[#allocation7 + $0x68] sm:$0xff]
        %v557 = vld [vmem:[#allocation7 + $0x70] sm:$0xff]
        %v558 = vld [vmem:[#allocation7 + $0x78] sm:$0xff]
        %v559 = vld [vmem:[%s5] sm:$0x1]
        %v561 = vlaneseq
        %v562 = vshrl.u32 %v561, 7
        %v563 = vsub.s32 0, %v562
        %v564 = vrot.slane %v559, %v563
        %566 = vmatprep.subr.mxu0 0.0
        %567 = vmatpush1.msra.mxu0 %v543
        %568 = vmatprep.subr.mxu0 0.0
        %569 = vmatpush1.msra.mxu0 %v544
        %570 = vmatprep.subr.mxu0 0.0
        %571 = vmatpush1.msra.mxu0 %v545
        %572 = vmatprep.subr.mxu0 0.0
        %573 = vmatpush1.msra.mxu0 %v546
        %574 = vmatprep.subr.mxu0 0.0
        %575 = vmatpush1.msra.mxu0 %v547
        %576 = vmatprep.subr.mxu0 0.0
        %577 = vmatpush1.msra.mxu0 %v548
        %578 = vmatprep.subr.mxu0 0.0
        %579 = vmatpush1.msra.mxu0 %v549
        %580 = vmatprep.subr.mxu0 0.0
        %581 = vmatpush1.msra.mxu0 %v550
        %582 = vmatprep.subr.mxu0 0.0
        %583 = vmatpush1.msra.mxu0 %v551
        %584 = vmatprep.subr.mxu0 0.0
        %585 = vmatpush1.msra.mxu0 %v552
        %586 = vmatprep.subr.mxu0 0.0
        %587 = vmatpush1.msra.mxu0 %v553
        %588 = vmatprep.subr.mxu0 0.0
        %589 = vmatpush1.msra.mxu0 %v554
        %590 = vmatprep.subr.mxu0 0.0
        %591 = vmatpush1.msra.mxu0 %v555
        %592 = vmatprep.subr.mxu0 0.0
        %593 = vmatpush1.msra.mxu0 %v556
        %594 = vmatprep.subr.mxu0 0.0
        %595 = vmatpush1.msra.mxu0 %v557
        %596 = vmatprep.subr.mxu0 0.0
        %597 = vmatpush1.msra.mxu0 %v558
        %598 = vmatprep.subr.mxu0 0.0
        %599 = vmatpush1.msra.mxu0 0.0
        %600 = vmatprep.subr.mxu0 0.0
        %601 = vmatpush1.msra.mxu0 0.0
        %602 = vmatprep.subr.mxu0 0.0
        %603 = vmatpush1.msra.mxu0 0.0
        %604 = vmatprep.subr.mxu0 0.0
        %605 = vmatpush1.msra.mxu0 0.0
        %606 = vmatprep.subr.mxu0 0.0
        %607 = vmatpush1.msra.mxu0 0.0
        %608 = vmatprep.subr.mxu0 0.0
        %609 = vmatpush1.msra.mxu0 0.0
        %610 = vmatprep.subr.mxu0 0.0
        %611 = vmatpush1.msra.mxu0 0.0
        %612 = vmatprep.subr.mxu0 0.0
        %613 = vmatpush1.msra.mxu0 0.0
        %614 = vmatprep.subr.mxu0 0.0
        %615 = vmatpush1.msra.mxu0 0.0
        %616 = vmatprep.subr.mxu0 0.0
        %617 = vmatpush1.msra.mxu0 0.0
        %618 = vmatprep.subr.mxu0 0.0
        %619 = vmatpush1.msra.mxu0 0.0
        %620 = vmatprep.subr.mxu0 0.0
        %621 = vmatpush1.msra.mxu0 0.0
        %622 = vmatprep.subr.mxu0 0.0
        %623 = vmatpush1.msra.mxu0 0.0
        %624 = vmatprep.subr.mxu0 0.0
        %625 = vmatpush1.msra.mxu0 0.0
        %626 = vmatprep.subr.mxu0 0.0
        %627 = vmatpush1.msra.mxu0 0.0
        %628 = vmatprep.subr.mxu0 0.0
        %629 = vmatpush1.msra.mxu0 0.0
        %630 = vmatprep.mubr.f32.mxu0 0.0
        %631 = vmatmul.mubr.f32.gmra.mrb[0].mxu0 %v542
        %v632 = vpop.f32.mrb[0].mxu0
        %v633 = vadd.f32 %v564, %v632
        %v634 = vpop.f32.mrb[0].mxu0
        %635 = vdwg.mxu0
        %v636 = vld [vmem:[%s6] sm:$0x1]
        %v637 = vld [vmem:[%s7] sm:$0x1]
        %638 = vadd.xlane.f32.xlu0 %v633
        %v639 = vpop.xlane.xlu0 %638
        %v640 = vrcp.pop 128.0
        %v641 = vmul.f32 %v639, %v640
        %v642 = vsub.f32 %v633, %v641
        %v643 = vmul.f32 %v642, %v642
        %644 = vadd.xlane.f32.xlu0 %v643
        %v645 = vpop.xlane.xlu0 %644
        %v646 = vmul.f32 %v645, %v640
        %v647 = vadd.f32 %v646, 1e-12
        %v648 = vrsqrt.pop %v647
        %v649 = vmul.f32 %v642, %v648
        %v651 = vlaneseq
        %v652 = vshrl.u32 %v651, 7
        %v653 = vsub.s32 0, %v652
        %v654 = vrot.slane %v636, %v653
        %v656 = vmul.f32 %v649, %v654
        %v658 = vlaneseq
        %v659 = vshrl.u32 %v658, 7
        %v660 = vsub.s32 0, %v659
        %v661 = vrot.slane %v637, %v660
        %v663 = vadd.f32 %v656, %v661
        %v664 = vld [vmem:[%s458] sm:$0xff]
        %v665 = vld [vmem:[%s458 + $0x8] sm:$0xff]
        %v666 = vld [vmem:[%s458 + $0x10] sm:$0xff]
        %v667 = vld [vmem:[%s458 + $0x18] sm:$0xff]
        %v668 = vld [vmem:[%s458 + $0x20] sm:$0xff]
        %v669 = vld [vmem:[%s458 + $0x28] sm:$0xff]
        %v670 = vld [vmem:[%s458 + $0x30] sm:$0xff]
        %v671 = vld [vmem:[%s458 + $0x38] sm:$0xff]
        %v672 = vld [vmem:[#allocation8] sm:$0xff]
        %v673 = vld [vmem:[#allocation8 + $0x8] sm:$0xff]
        %v674 = vld [vmem:[#allocation8 + $0x10] sm:$0xff]
        %v675 = vld [vmem:[#allocation8 + $0x18] sm:$0xff]
        %v676 = vld [vmem:[#allocation8 + $0x20] sm:$0xff]
        %v677 = vld [vmem:[#allocation8 + $0x28] sm:$0xff]
        %v678 = vld [vmem:[#allocation8 + $0x30] sm:$0xff]
        %v679 = vld [vmem:[#allocation8 + $0x38] sm:$0xff]
        %v680 = vld [vmem:[#allocation8 + $0x40] sm:$0xff]
        %v681 = vld [vmem:[#allocation8 + $0x48] sm:$0xff]
        %v682 = vld [vmem:[#allocation8 + $0x50] sm:$0xff]
        %v683 = vld [vmem:[#allocation8 + $0x58] sm:$0xff]
        %v684 = vld [vmem:[#allocation8 + $0x60] sm:$0xff]
        %v685 = vld [vmem:[#allocation8 + $0x68] sm:$0xff]
        %v686 = vld [vmem:[#allocation8 + $0x70] sm:$0xff]
        %v687 = vld [vmem:[#allocation8 + $0x78] sm:$0xff]
        %v688 = vld [vmem:[%s9] sm:$0x1]
        %v690 = vlaneseq
        %v691 = vshrl.u32 %v690, 7
        %v692 = vsub.s32 0, %v691
        %v693 = vrot.slane %v688, %v692
        %695 = vmatprep.subr.mxu0 0.0
        %696 = vmatpush1.msra.mxu0 %v672
        %697 = vmatprep.subr.mxu0 0.0
        %698 = vmatpush1.msra.mxu0 %v673
        %699 = vmatprep.subr.mxu0 0.0
        %700 = vmatpush1.msra.mxu0 %v674
        %701 = vmatprep.subr.mxu0 0.0
        %702 = vmatpush1.msra.mxu0 %v675
        %703 = vmatprep.subr.mxu0 0.0
        %704 = vmatpush1.msra.mxu0 %v676
        %705 = vmatprep.subr.mxu0 0.0
        %706 = vmatpush1.msra.mxu0 %v677
        %707 = vmatprep.subr.mxu0 0.0
        %708 = vmatpush1.msra.mxu0 %v678
        %709 = vmatprep.subr.mxu0 0.0
        %710 = vmatpush1.msra.mxu0 %v679
        %711 = vmatprep.subr.mxu0 0.0
        %712 = vmatpush1.msra.mxu0 %v680
        %713 = vmatprep.subr.mxu0 0.0
        %714 = vmatpush1.msra.mxu0 %v681
        %715 = vmatprep.subr.mxu0 0.0
        %716 = vmatpush1.msra.mxu0 %v682
        %717 = vmatprep.subr.mxu0 0.0
        %718 = vmatpush1.msra.mxu0 %v683
        %719 = vmatprep.subr.mxu0 0.0
        %720 = vmatpush1.msra.mxu0 %v684
        %721 = vmatprep.subr.mxu0 0.0
        %722 = vmatpush1.msra.mxu0 %v685
        %723 = vmatprep.subr.mxu0 0.0
        %724 = vmatpush1.msra.mxu0 %v686
        %725 = vmatprep.subr.mxu0 0.0
        %726 = vmatpush1.msra.mxu0 %v687
        %727 = vmatprep.subr.mxu0 0.0
        %728 = vmatpush1.msra.mxu0 0.0
        %729 = vmatprep.subr.mxu0 0.0
        %730 = vmatpush1.msra.mxu0 0.0
        %731 = vmatprep.subr.mxu0 0.0
        %732 = vmatpush1.msra.mxu0 0.0
        %733 = vmatprep.subr.mxu0 0.0
        %734 = vmatpush1.msra.mxu0 0.0
        %735 = vmatprep.subr.mxu0 0.0
        %736 = vmatpush1.msra.mxu0 0.0
        %737 = vmatprep.subr.mxu0 0.0
        %738 = vmatpush1.msra.mxu0 0.0
        %739 = vmatprep.subr.mxu0 0.0
        %740 = vmatpush1.msra.mxu0 0.0
        %741 = vmatprep.subr.mxu0 0.0
        %742 = vmatpush1.msra.mxu0 0.0
        %743 = vmatprep.subr.mxu0 0.0
        %744 = vmatpush1.msra.mxu0 0.0
        %745 = vmatprep.subr.mxu0 0.0
        %746 = vmatpush1.msra.mxu0 0.0
        %747 = vmatprep.subr.mxu0 0.0
        %748 = vmatpush1.msra.mxu0 0.0
        %749 = vmatprep.subr.mxu0 0.0
        %750 = vmatpush1.msra.mxu0 0.0
        %751 = vmatprep.subr.mxu0 0.0
        %752 = vmatpush1.msra.mxu0 0.0
        %753 = vmatprep.subr.mxu0 0.0
        %754 = vmatpush1.msra.mxu0 0.0
        %755 = vmatprep.subr.mxu0 0.0
        %756 = vmatpush1.msra.mxu0 0.0
        %757 = vmatprep.subr.mxu0 0.0
        %758 = vmatpush1.msra.mxu0 0.0
        %759 = vmatprep.mubr.f32.mxu0 0.0
        %760 = vmatmul.mubr.f32.gmra.mrb[0].mxu0 %v664
        %v761 = vpop.f32.mrb[0].mxu0
        %v762 = vadd.f32 %v693, %v761
        %v763 = vpop.f32.mrb[0].mxu0
        %764 = vmatprep.mubr.f32.mxu0 0.0
        %765 = vmatmul.mubr.f32.gmra.mrb[0].mxu0 %v665
        %v766 = vpop.f32.mrb[0].mxu0
        %v767 = vadd.f32 %v693, %v766
        %v768 = vpop.f32.mrb[0].mxu0
        %769 = vmatprep.mubr.f32.mxu0 0.0
        %770 = vmatmul.mubr.f32.gmra.mrb[0].mxu0 %v666
        %v771 = vpop.f32.mrb[0].mxu0
        %v772 = vadd.f32 %v693, %v771
        %v773 = vpop.f32.mrb[0].mxu0
        %774 = vmatprep.mubr.f32.mxu0 0.0
        %775 = vmatmul.mubr.f32.gmra.mrb[0].mxu0 %v667
        %v776 = vpop.f32.mrb[0].mxu0
        %v777 = vadd.f32 %v693, %v776
        %v778 = vpop.f32.mrb[0].mxu0
        %779 = vmatprep.mubr.f32.mxu0 0.0
        %780 = vmatmul.mubr.f32.gmra.mrb[0].mxu0 %v668
        %v781 = vpop.f32.mrb[0].mxu0
        %v782 = vadd.f32 %v693, %v781
        %v783 = vpop.f32.mrb[0].mxu0
        %784 = vmatprep.mubr.f32.mxu0 0.0
        %785 = vmatmul.mubr.f32.gmra.mrb[0].mxu0 %v669
        %v786 = vpop.f32.mrb[0].mxu0
        %v787 = vadd.f32 %v693, %v786
        %v788 = vpop.f32.mrb[0].mxu0
        %789 = vmatprep.mubr.f32.mxu0 0.0
        %790 = vmatmul.mubr.f32.gmra.mrb[0].mxu0 %v670
        %v791 = vpop.f32.mrb[0].mxu0
        %v792 = vadd.f32 %v693, %v791
        %v793 = vpop.f32.mrb[0].mxu0
        %794 = vmatprep.mubr.f32.mxu0 0.0
        %795 = vmatmul.mubr.f32.gmra.mrb[0].mxu0 %v671
        %v796 = vpop.f32.mrb[0].mxu0
        %v797 = vadd.f32 %v693, %v796
        %v798 = vpop.f32.mrb[0].mxu0
        %799 = vdwg.mxu0
        %v800 = vld [vmem:[%s10] sm:$0x1]
        %v801 = vld [vmem:[%s11] sm:$0x1]
        %802 = vadd.xlane.f32.xlu0 %v762
        %v803 = vpop.xlane.xlu0 %802
        %804 = vadd.xlane.f32.xlu0 %v767
        %v805 = vpop.xlane.xlu0 %804
        %806 = vadd.xlane.f32.xlu0 %v772
        %v807 = vpop.xlane.xlu0 %806
        %808 = vadd.xlane.f32.xlu0 %v777
        %v809 = vpop.xlane.xlu0 %808
        %810 = vadd.xlane.f32.xlu0 %v782
        %v811 = vpop.xlane.xlu0 %810
        %812 = vadd.xlane.f32.xlu0 %v787
        %v813 = vpop.xlane.xlu0 %812
        %814 = vadd.xlane.f32.xlu0 %v792
        %v815 = vpop.xlane.xlu0 %814
        %816 = vadd.xlane.f32.xlu0 %v797
        %v817 = vpop.xlane.xlu0 %816
        %v818 = vmul.f32 %v803, %v640
        %v819 = vmul.f32 %v805, %v640
        %v820 = vmul.f32 %v807, %v640
        %v821 = vmul.f32 %v809, %v640
        %v822 = vmul.f32 %v811, %v640
        %v823 = vmul.f32 %v813, %v640
        %v824 = vmul.f32 %v815, %v640
        %v825 = vmul.f32 %v817, %v640
        %v826 = vsub.f32 %v762, %v818
        %v827 = vsub.f32 %v767, %v819
        %v828 = vsub.f32 %v772, %v820
        %v829 = vsub.f32 %v777, %v821
        %v830 = vsub.f32 %v782, %v822
        %v831 = vsub.f32 %v787, %v823
        %v832 = vsub.f32 %v792, %v824
        %v833 = vsub.f32 %v797, %v825
        %v834 = vmul.f32 %v826, %v826
        %v835 = vmul.f32 %v827, %v827
        %v836 = vmul.f32 %v828, %v828
        %v837 = vmul.f32 %v829, %v829
        %v838 = vmul.f32 %v830, %v830
        %v839 = vmul.f32 %v831, %v831
        %v840 = vmul.f32 %v832, %v832
        %v841 = vmul.f32 %v833, %v833
        %842 = vadd.xlane.f32.xlu0 %v834
        %v843 = vpop.xlane.xlu0 %842
        %844 = vadd.xlane.f32.xlu0 %v835
        %v845 = vpop.xlane.xlu0 %844
        %846 = vadd.xlane.f32.xlu0 %v836
        %v847 = vpop.xlane.xlu0 %846
        %848 = vadd.xlane.f32.xlu0 %v837
        %v849 = vpop.xlane.xlu0 %848
        %850 = vadd.xlane.f32.xlu0 %v838
        %v851 = vpop.xlane.xlu0 %850
        %852 = vadd.xlane.f32.xlu0 %v839
        %v853 = vpop.xlane.xlu0 %852
        %854 = vadd.xlane.f32.xlu0 %v840
        %v855 = vpop.xlane.xlu0 %854
        %856 = vadd.xlane.f32.xlu0 %v841
        %v857 = vpop.xlane.xlu0 %856
        %v858 = vmul.f32 %v843, %v640
        %v859 = vmul.f32 %v845, %v640
        %v860 = vmul.f32 %v847, %v640
        %v861 = vmul.f32 %v849, %v640
        %v862 = vmul.f32 %v851, %v640
        %v863 = vmul.f32 %v853, %v640
        %v864 = vmul.f32 %v855, %v640
        %v865 = vmul.f32 %v857, %v640
        %v866 = vadd.f32 %v858, 1e-12
        %v867 = vadd.f32 %v859, 1e-12
        %v868 = vadd.f32 %v860, 1e-12
        %v869 = vadd.f32 %v861, 1e-12
        %v870 = vadd.f32 %v862, 1e-12
        %v871 = vadd.f32 %v863, 1e-12
        %v872 = vadd.f32 %v864, 1e-12
        %v873 = vadd.f32 %v865, 1e-12
        %v874 = vrsqrt.pop %v866
        %v875 = vrsqrt.pop %v867
        %v876 = vrsqrt.pop %v868
        %v877 = vrsqrt.pop %v869
        %v878 = vrsqrt.pop %v870
        %v879 = vrsqrt.pop %v871
        %v880 = vrsqrt.pop %v872
        %v881 = vrsqrt.pop %v873
        %v882 = vmul.f32 %v826, %v874
        %v883 = vmul.f32 %v827, %v875
        %v884 = vmul.f32 %v828, %v876
        %v885 = vmul.f32 %v829, %v877
        %v886 = vmul.f32 %v830, %v878
        %v887 = vmul.f32 %v831, %v879
        %v888 = vmul.f32 %v832, %v880
        %v889 = vmul.f32 %v833, %v881
        %v891 = vlaneseq
        %v892 = vshrl.u32 %v891, 7
        %v893 = vsub.s32 0, %v892
        %v894 = vrot.slane %v800, %v893
        %v896 = vmul.f32 %v882, %v894
        %v897 = vmul.f32 %v883, %v894
        %v898 = vmul.f32 %v884, %v894
        %v899 = vmul.f32 %v885, %v894
        %v900 = vmul.f32 %v886, %v894
        %v901 = vmul.f32 %v887, %v894
        %v902 = vmul.f32 %v888, %v894
        %v903 = vmul.f32 %v889, %v894
        %v905 = vlaneseq
        %v906 = vshrl.u32 %v905, 7
        %v907 = vsub.s32 0, %v906
        %v908 = vrot.slane %v801, %v907
        %v910 = vadd.f32 %v896, %v908
        %v911 = vadd.f32 %v897, %v908
        %v912 = vadd.f32 %v898, %v908
        %v913 = vadd.f32 %v899, %v908
        %v914 = vadd.f32 %v900, %v908
        %v915 = vadd.f32 %v901, %v908
        %v916 = vadd.f32 %v902, %v908
        %v917 = vadd.f32 %v903, %v908
        %v919 = vcombine.high %v663, %v663
        %v921 = vunpack.c.l.s4 1966171168
        %v922 = vunpack.c.0.s8 %v921
        %v923 = vlaneseq
        %v924 = vshrl.u32 %v923, 7
        %v925 = vsub.s32 %v922, %v924
        %v926 = vrot.slane %v663, %v925
        %v928 = vunpack.c.l.s4 1966171168
        %v929 = vunpack.c.0.s8 %v928
        %v930 = vlaneseq
        %v931 = vshrl.u32 %v930, 7
        %v932 = vsub.s32 %v929, %v931
        %v933 = vrot.slane %v919, %v932
        %v934 = vcombine.high %v926, %v926
        %v935 = vcombine.high %v933, %v933
        %v937 = vunpack.c.l.s4 1966171168
        %v938 = vunpack.c.0.s8 %v937
        %v939 = vlaneseq
        %v940 = vshrl.u32 %v939, 7
        %v941 = vsub.s32 %v938, %v940
        %v942 = vrot.slane %v926, %v941
        %v944 = vunpack.c.l.s4 1966171168
        %v945 = vunpack.c.0.s8 %v944
        %v946 = vlaneseq
        %v947 = vshrl.u32 %v946, 7
        %v948 = vsub.s32 %v945, %v947
        %v949 = vrot.slane %v933, %v948
        %v951 = vunpack.c.l.s4 1966171168
        %v952 = vunpack.c.0.s8 %v951
        %v953 = vlaneseq
        %v954 = vshrl.u32 %v953, 7
        %v955 = vsub.s32 %v952, %v954
        %v956 = vrot.slane %v934, %v955
        %v958 = vunpack.c.l.s4 1966171168
        %v959 = vunpack.c.0.s8 %v958
        %v960 = vlaneseq
        %v961 = vshrl.u32 %v960, 7
        %v962 = vsub.s32 %v959, %v961
        %v963 = vrot.slane %v935, %v962
        %v964 = vcombine.high %v942, %v942
        %v965 = vcombine.high %v949, %v949
        %v966 = vcombine.high %v956, %v956
        %v967 = vcombine.high %v963, %v963
        %v968 = vlaneseq
        %v969 = vshrl.u32 %v968, 7
        %v970 = vsub.s32 0, %v969
        %v971 = vrot.slane %v942, %v970
        %v972 = vlaneseq
        %v973 = vshrl.u32 %v972, 7
        %v974 = vsub.s32 0, %v973
        %v975 = vrot.slane %v956, %v974
        %v976 = vlaneseq
        %v977 = vshrl.u32 %v976, 7
        %v978 = vsub.s32 0, %v977
        %v979 = vrot.slane %v964, %v978
        %v980 = vlaneseq
        %v981 = vshrl.u32 %v980, 7
        %v982 = vsub.s32 0, %v981
        %v983 = vrot.slane %v966, %v982
        %v984 = vlaneseq
        %v985 = vshrl.u32 %v984, 7
        %v986 = vsub.s32 0, %v985
        %v987 = vrot.slane %v949, %v986
        %v988 = vlaneseq
        %v989 = vshrl.u32 %v988, 7
        %v990 = vsub.s32 0, %v989
        %v991 = vrot.slane %v963, %v990
        %v992 = vlaneseq
        %v993 = vshrl.u32 %v992, 7
        %v994 = vsub.s32 0, %v993
        %v995 = vrot.slane %v965, %v994
        %v996 = vlaneseq
        %v997 = vshrl.u32 %v996, 7
        %v998 = vsub.s32 0, %v997
        %v999 = vrot.slane %v967, %v998
        %v1008 = vmul.f32 %v910, %v971
        %v1009 = vmul.f32 %v911, %v975
        %v1010 = vmul.f32 %v912, %v979
        %v1011 = vmul.f32 %v913, %v983
        %v1012 = vmul.f32 %v914, %v987
        %v1013 = vmul.f32 %v915, %v991
        %v1014 = vmul.f32 %v916, %v995
        %v1015 = vmul.f32 %v917, %v999
        %1016 = vadd.xlane.f32.xlu0 %v1008
        %v1017 = vpop.xlane.xlu0 %1016
        %1018 = vadd.xlane.f32.xlu0 %v1009
        %v1019 = vpop.xlane.xlu0 %1018
        %1020 = vadd.xlane.f32.xlu0 %v1010
        %v1021 = vpop.xlane.xlu0 %1020
        %1022 = vadd.xlane.f32.xlu0 %v1011
        %v1023 = vpop.xlane.xlu0 %1022
        %1024 = vadd.xlane.f32.xlu0 %v1012
        %v1025 = vpop.xlane.xlu0 %1024
        %1026 = vadd.xlane.f32.xlu0 %v1013
        %v1027 = vpop.xlane.xlu0 %1026
        %1028 = vadd.xlane.f32.xlu0 %v1014
        %v1029 = vpop.xlane.xlu0 %1028
        %1030 = vadd.xlane.f32.xlu0 %v1015
        %v1031 = vpop.xlane.xlu0 %1030
        %v1040 = vlaneseq
        %v1041 = vand.u32 %v1040, 127
        %v1042 = vlaneseq
        %v1043 = vshrl.u32 %v1042, 7
        %v1044 = vsub.s32 %v1041, %v1043
        %v1045 = vrot.slane %v1017, %v1044
        %v1046 = vlaneseq
        %v1047 = vshrl.u32 %v1046, 7
        %v1048 = vsub.s32 %v1041, %v1047
        %v1049 = vrot.slane %v1019, %v1048
        %v1050 = vlaneseq
        %v1051 = vshrl.u32 %v1050, 7
        %v1052 = vsub.s32 %v1041, %v1051
        %v1053 = vrot.slane %v1021, %v1052
        %v1054 = vlaneseq
        %v1055 = vshrl.u32 %v1054, 7
        %v1056 = vsub.s32 %v1041, %v1055
        %v1057 = vrot.slane %v1023, %v1056
        %v1058 = vlaneseq
        %v1059 = vshrl.u32 %v1058, 7
        %v1060 = vsub.s32 %v1041, %v1059
        %v1061 = vrot.slane %v1025, %v1060
        %v1062 = vlaneseq
        %v1063 = vshrl.u32 %v1062, 7
        %v1064 = vsub.s32 %v1041, %v1063
        %v1065 = vrot.slane %v1027, %v1064
        %v1066 = vlaneseq
        %v1067 = vshrl.u32 %v1066, 7
        %v1068 = vsub.s32 %v1041, %v1067
        %v1069 = vrot.slane %v1029, %v1068
        %v1070 = vlaneseq
        %v1071 = vshrl.u32 %v1070, 7
        %v1072 = vsub.s32 %v1041, %v1071
        %v1073 = vrot.slane %v1031, %v1072
        %vm1074 = vcmask 1041409
        %v1075 = vsel %vm1074, %v1049, %v1045
        %vm1076 = vcmask 1042434
        %v1077 = vsel %vm1076, %v1053, %v1075
        %vm1078 = vcmask 1043459
        %v1079 = vsel %vm1078, %v1057, %v1077
        %vm1080 = vcmask 1044484
        %v1081 = vsel %vm1080, %v1061, %v1079
        %vm1082 = vcmask 1045509
        %v1083 = vsel %vm1082, %v1065, %v1081
        %vm1084 = vcmask 1046534
        %v1085 = vsel %vm1084, %v1069, %v1083
        %vm1086 = vcmask 1047559
        %v1087 = vsel %vm1086, %v1073, %v1085
        %vm1089 = vcmask 64512
        %v1090 = vsel %vm1089, %v1087, -inf
        %1091 = vmax.xlane.f32.xlu0 %v1090
        %v1092 = vpop.xlane.xlu0 %1091
        %v1094 = vlaneseq
        %v1095 = vshrl.u32 %v1094, 7
        %v1096 = vsub.s32 0, %v1095
        %v1097 = vrot.slane %v1092, %v1096
        %v1098 = vlaneseq
        %v1099 = vshrl.u32 %v1098, 7
        %v1100 = vsub.s32 1, %v1099
        %v1101 = vrot.slane %v1092, %v1100
        %v1102 = vlaneseq
        %v1103 = vshrl.u32 %v1102, 7
        %v1104 = vsub.s32 2, %v1103
        %v1105 = vrot.slane %v1092, %v1104
        %v1106 = vlaneseq
        %v1107 = vshrl.u32 %v1106, 7
        %v1108 = vsub.s32 3, %v1107
        %v1109 = vrot.slane %v1092, %v1108
        %v1110 = vlaneseq
        %v1111 = vshrl.u32 %v1110, 7
        %v1112 = vsub.s32 4, %v1111
        %v1113 = vrot.slane %v1092, %v1112
        %v1114 = vlaneseq
        %v1115 = vshrl.u32 %v1114, 7
        %v1116 = vsub.s32 5, %v1115
        %v1117 = vrot.slane %v1092, %v1116
        %v1118 = vlaneseq
        %v1119 = vshrl.u32 %v1118, 7
        %v1120 = vsub.s32 6, %v1119
        %v1121 = vrot.slane %v1092, %v1120
        %v1122 = vlaneseq
        %v1123 = vshrl.u32 %v1122, 7
        %v1124 = vsub.s32 7, %v1123
        %v1125 = vrot.slane %v1092, %v1124
        %v1134 = vsub.f32 %v1017, %v1097
        %v1135 = vsub.f32 %v1019, %v1101
        %v1136 = vsub.f32 %v1021, %v1105
        %v1137 = vsub.f32 %v1023, %v1109
        %v1138 = vsub.f32 %v1025, %v1113
        %v1139 = vsub.f32 %v1027, %v1117
        %v1140 = vsub.f32 %v1029, %v1121
        %v1141 = vsub.f32 %v1031, %v1125
        %v1142 = vmul.f32 %v1134, 1.442695
        %v1143 = vpow.pop %v1142
        %v1144 = vmul.f32 %v1135, 1.442695
        %v1145 = vpow.pop %v1144
        %v1146 = vmul.f32 %v1136, 1.442695
        %v1147 = vpow.pop %v1146
        %v1148 = vmul.f32 %v1137, 1.442695
        %v1149 = vpow.pop %v1148
        %v1150 = vmul.f32 %v1138, 1.442695
        %v1151 = vpow.pop %v1150
        %v1152 = vmul.f32 %v1139, 1.442695
        %v1153 = vpow.pop %v1152
        %v1154 = vmul.f32 %v1140, 1.442695
        %v1155 = vpow.pop %v1154
        %v1156 = vmul.f32 %v1141, 1.442695
        %v1157 = vpow.pop %v1156
        %1166 = vset.pattern.permute.xlu0 0
        %1167 = vperm.xlu0 %1166, %v1143
        %v1168 = vpop.permute.xlu0 %1167
        %1169 = vset.pattern.permute.xlu0 0
        %1170 = vperm.xlu0 %1169, %v1145
        %v1171 = vpop.permute.xlu0 %1170
        %1172 = vset.pattern.permute.xlu0 0
        %1173 = vperm.xlu0 %1172, %v1147
        %v1174 = vpop.permute.xlu0 %1173
        %1175 = vset.pattern.permute.xlu0 0
        %1176 = vperm.xlu0 %1175, %v1149
        %v1177 = vpop.permute.xlu0 %1176
        %1178 = vset.pattern.permute.xlu0 0
        %1179 = vperm.xlu0 %1178, %v1151
        %v1180 = vpop.permute.xlu0 %1179
        %1181 = vset.pattern.permute.xlu0 0
        %1182 = vperm.xlu0 %1181, %v1153
        %v1183 = vpop.permute.xlu0 %1182
        %1184 = vset.pattern.permute.xlu0 0
        %1185 = vperm.xlu0 %1184, %v1155
        %v1186 = vpop.permute.xlu0 %1185
        %1187 = vset.pattern.permute.xlu0 0
        %1188 = vperm.xlu0 %1187, %v1157
        %v1189 = vpop.permute.xlu0 %1188
        %v1190 = vlaneseq
        %v1191 = vshrl.u32 %v1190, 7
        %v1192 = vsub.s32 %v1041, %v1191
        %v1193 = vrot.slane %v1168, %v1192
        %v1194 = vlaneseq
        %v1195 = vshrl.u32 %v1194, 7
        %v1196 = vsub.s32 %v1041, %v1195
        %v1197 = vrot.slane %v1171, %v1196
        %v1198 = vlaneseq
        %v1199 = vshrl.u32 %v1198, 7
        %v1200 = vsub.s32 %v1041, %v1199
        %v1201 = vrot.slane %v1174, %v1200
        %v1202 = vlaneseq
        %v1203 = vshrl.u32 %v1202, 7
        %v1204 = vsub.s32 %v1041, %v1203
        %v1205 = vrot.slane %v1177, %v1204
        %v1206 = vlaneseq
        %v1207 = vshrl.u32 %v1206, 7
        %v1208 = vsub.s32 %v1041, %v1207
        %v1209 = vrot.slane %v1180, %v1208
        %v1210 = vlaneseq
        %v1211 = vshrl.u32 %v1210, 7
        %v1212 = vsub.s32 %v1041, %v1211
        %v1213 = vrot.slane %v1183, %v1212
        %v1214 = vlaneseq
        %v1215 = vshrl.u32 %v1214, 7
        %v1216 = vsub.s32 %v1041, %v1215
        %v1217 = vrot.slane %v1186, %v1216
        %v1218 = vlaneseq
        %v1219 = vshrl.u32 %v1218, 7
        %v1220 = vsub.s32 %v1041, %v1219
        %v1221 = vrot.slane %v1189, %v1220
        %v1222 = vsel %vm1074, %v1197, %v1193
        %v1223 = vsel %vm1076, %v1201, %v1222
        %v1224 = vsel %vm1078, %v1205, %v1223
        %v1225 = vsel %vm1080, %v1209, %v1224
        %v1226 = vsel %vm1082, %v1213, %v1225
        %v1227 = vsel %vm1084, %v1217, %v1226
        %v1228 = vsel %vm1086, %v1221, %v1227
        %v1230 = vsel %vm1089, %v1228, 0.0
        %1231 = vadd.xlane.f32.xlu0 %v1230
        %v1232 = vpop.xlane.xlu0 %1231
        %v1234 = vlaneseq
        %v1235 = vshrl.u32 %v1234, 7
        %v1236 = vsub.s32 0, %v1235
        %v1237 = vrot.slane %v1232, %v1236
        %v1238 = vlaneseq
        %v1239 = vshrl.u32 %v1238, 7
        %v1240 = vsub.s32 1, %v1239
        %v1241 = vrot.slane %v1232, %v1240
        %v1242 = vlaneseq
        %v1243 = vshrl.u32 %v1242, 7
        %v1244 = vsub.s32 2, %v1243
        %v1245 = vrot.slane %v1232, %v1244
        %v1246 = vlaneseq
        %v1247 = vshrl.u32 %v1246, 7
        %v1248 = vsub.s32 3, %v1247
        %v1249 = vrot.slane %v1232, %v1248
        %v1250 = vlaneseq
        %v1251 = vshrl.u32 %v1250, 7
        %v1252 = vsub.s32 4, %v1251
        %v1253 = vrot.slane %v1232, %v1252
        %v1254 = vlaneseq
        %v1255 = vshrl.u32 %v1254, 7
        %v1256 = vsub.s32 5, %v1255
        %v1257 = vrot.slane %v1232, %v1256
        %v1258 = vlaneseq
        %v1259 = vshrl.u32 %v1258, 7
        %v1260 = vsub.s32 6, %v1259
        %v1261 = vrot.slane %v1232, %v1260
        %v1262 = vlaneseq
        %v1263 = vshrl.u32 %v1262, 7
        %v1264 = vsub.s32 7, %v1263
        %v1265 = vrot.slane %v1232, %v1264
        %v1274 = vrcp.pop %v1237
        %v1275 = vmul.f32 %v1143, %v1274
        %v1276 = vrcp.pop %v1241
        %v1277 = vmul.f32 %v1145, %v1276
        %v1278 = vrcp.pop %v1245
        %v1279 = vmul.f32 %v1147, %v1278
        %v1280 = vrcp.pop %v1249
        %v1281 = vmul.f32 %v1149, %v1280
        %v1282 = vrcp.pop %v1253
        %v1283 = vmul.f32 %v1151, %v1282
        %v1284 = vrcp.pop %v1257
        %v1285 = vmul.f32 %v1153, %v1284
        %v1286 = vrcp.pop %v1261
        %v1287 = vmul.f32 %v1155, %v1286
        %v1288 = vrcp.pop %v1265
        %v1289 = vmul.f32 %v1157, %v1288
        %v1290 = vld [vmem:[%s540] sm:$0x3]
        %v1291 = vld [vmem:[%s540 + $0x2] sm:$0x3]
        %v1292 = vld [vmem:[%s540 + $0x4] sm:$0x3]
        %v1293 = vld [vmem:[%s540 + $0x6] sm:$0x3]
        %v1294 = vld [vmem:[%s540 + $0x8] sm:$0x3]
        %v1295 = vld [vmem:[%s540 + $0xa] sm:$0x3]
        %v1296 = vld [vmem:[%s540 + $0xc] sm:$0x3]
        %v1297 = vld [vmem:[%s540 + $0xe] sm:$0x3]
        %v1306 = vlaneseq
        %v1307 = vshrl.u32 %v1306, 7
        %v1308 = vsub.s32 0, %v1307
        %v1309 = vrot.slane %v1290, %v1308
        %1311 = vbcast.lane.b32.xlu0 %v1309, 256
        %v1312 = vpop.permute.xlu0 %1311
        %v1313 = vlaneseq
        %v1314 = vshrl.u32 %v1313, 7
        %v1315 = vsub.s32 1, %v1314
        %v1316 = vrot.slane %v1290, %v1315
        %1318 = vbcast.lane.b32.xlu0 %v1316, 256
        %v1319 = vpop.permute.xlu0 %1318
        %v1320 = vlaneseq
        %v1321 = vshrl.u32 %v1320, 7
        %v1322 = vsub.s32 0, %v1321
        %v1323 = vrot.slane %v1291, %v1322
        %1325 = vbcast.lane.b32.xlu0 %v1323, 256
        %v1326 = vpop.permute.xlu0 %1325
        %v1327 = vlaneseq
        %v1328 = vshrl.u32 %v1327, 7
        %v1329 = vsub.s32 1, %v1328
        %v1330 = vrot.slane %v1291, %v1329
        %1332 = vbcast.lane.b32.xlu0 %v1330, 256
        %v1333 = vpop.permute.xlu0 %1332
        %v1334 = vlaneseq
        %v1335 = vshrl.u32 %v1334, 7
        %v1336 = vsub.s32 0, %v1335
        %v1337 = vrot.slane %v1292, %v1336
        %1339 = vbcast.lane.b32.xlu0 %v1337, 256
        %v1340 = vpop.permute.xlu0 %1339
        %v1341 = vlaneseq
        %v1342 = vshrl.u32 %v1341, 7
        %v1343 = vsub.s32 1, %v1342
        %v1344 = vrot.slane %v1292, %v1343
        %1346 = vbcast.lane.b32.xlu0 %v1344, 256
        %v1347 = vpop.permute.xlu0 %1346
        %v1348 = vlaneseq
        %v1349 = vshrl.u32 %v1348, 7
        %v1350 = vsub.s32 0, %v1349
        %v1351 = vrot.slane %v1293, %v1350
        %1353 = vbcast.lane.b32.xlu0 %v1351, 256
        %v1354 = vpop.permute.xlu0 %1353
        %v1355 = vlaneseq
        %v1356 = vshrl.u32 %v1355, 7
        %v1357 = vsub.s32 1, %v1356
        %v1358 = vrot.slane %v1293, %v1357
        %1360 = vbcast.lane.b32.xlu0 %v1358, 256
        %v1361 = vpop.permute.xlu0 %1360
        %v1362 = vlaneseq
        %v1363 = vshrl.u32 %v1362, 7
        %v1364 = vsub.s32 0, %v1363
        %v1365 = vrot.slane %v1294, %v1364
        %1367 = vbcast.lane.b32.xlu0 %v1365, 256
        %v1368 = vpop.permute.xlu0 %1367
        %v1369 = vlaneseq
        %v1370 = vshrl.u32 %v1369, 7
        %v1371 = vsub.s32 1, %v1370
        %v1372 = vrot.slane %v1294, %v1371
        %1374 = vbcast.lane.b32.xlu0 %v1372, 256
        %v1375 = vpop.permute.xlu0 %1374
        %v1376 = vlaneseq
        %v1377 = vshrl.u32 %v1376, 7
        %v1378 = vsub.s32 0, %v1377
        %v1379 = vrot.slane %v1295, %v1378
        %1381 = vbcast.lane.b32.xlu0 %v1379, 256
        %v1382 = vpop.permute.xlu0 %1381
        %v1383 = vlaneseq
        %v1384 = vshrl.u32 %v1383, 7
        %v1385 = vsub.s32 1, %v1384
        %v1386 = vrot.slane %v1295, %v1385
        %1388 = vbcast.lane.b32.xlu0 %v1386, 256
        %v1389 = vpop.permute.xlu0 %1388
        %v1390 = vlaneseq
        %v1391 = vshrl.u32 %v1390, 7
        %v1392 = vsub.s32 0, %v1391
        %v1393 = vrot.slane %v1296, %v1392
        %1395 = vbcast.lane.b32.xlu0 %v1393, 256
        %v1396 = vpop.permute.xlu0 %1395
        %v1397 = vlaneseq
        %v1398 = vshrl.u32 %v1397, 7
        %v1399 = vsub.s32 1, %v1398
        %v1400 = vrot.slane %v1296, %v1399
        %1402 = vbcast.lane.b32.xlu0 %v1400, 256
        %v1403 = vpop.permute.xlu0 %1402
        %v1404 = vlaneseq
        %v1405 = vshrl.u32 %v1404, 7
        %v1406 = vsub.s32 0, %v1405
        %v1407 = vrot.slane %v1297, %v1406
        %1409 = vbcast.lane.b32.xlu0 %v1407, 256
        %v1410 = vpop.permute.xlu0 %1409
        %v1411 = vlaneseq
        %v1412 = vshrl.u32 %v1411, 7
        %v1413 = vsub.s32 1, %v1412
        %v1414 = vrot.slane %v1297, %v1413
        %1416 = vbcast.lane.b32.xlu0 %v1414, 256
        %v1417 = vpop.permute.xlu0 %1416
        %v1434 = vadd.f32 %v1275, %v1312
        %v1435 = vadd.f32 %v1275, %v1319
        %v1436 = vadd.f32 %v1277, %v1326
        %v1437 = vadd.f32 %v1277, %v1333
        %v1438 = vadd.f32 %v1279, %v1340
        %v1439 = vadd.f32 %v1279, %v1347
        %v1440 = vadd.f32 %v1281, %v1354
        %v1441 = vadd.f32 %v1281, %v1361
        %v1442 = vadd.f32 %v1283, %v1368
        %v1443 = vadd.f32 %v1283, %v1375
        %v1444 = vadd.f32 %v1285, %v1382
        %v1445 = vadd.f32 %v1285, %v1389
        %v1446 = vadd.f32 %v1287, %v1396
        %v1447 = vadd.f32 %v1287, %v1403
        %v1448 = vadd.f32 %v1289, %v1410
        %v1449 = vadd.f32 %v1289, %v1417
        %1466 = vset.pattern.permute.xlu0 0
        %1467 = vperm.xlu0 %1466, %v1434
        %v1468 = vpop.permute.xlu0 %1467
        %1469 = vset.pattern.permute.xlu0 0
        %1470 = vperm.xlu0 %1469, %v1435
        %v1471 = vpop.permute.xlu0 %1470
        %1472 = vset.pattern.permute.xlu0 0
        %1473 = vperm.xlu0 %1472, %v1436
        %v1474 = vpop.permute.xlu0 %1473
        %1475 = vset.pattern.permute.xlu0 0
        %1476 = vperm.xlu0 %1475, %v1437
        %v1477 = vpop.permute.xlu0 %1476
        %1478 = vset.pattern.permute.xlu0 0
        %1479 = vperm.xlu0 %1478, %v1438
        %v1480 = vpop.permute.xlu0 %1479
        %1481 = vset.pattern.permute.xlu0 0
        %1482 = vperm.xlu0 %1481, %v1439
        %v1483 = vpop.permute.xlu0 %1482
        %1484 = vset.pattern.permute.xlu0 0
        %1485 = vperm.xlu0 %1484, %v1440
        %v1486 = vpop.permute.xlu0 %1485
        %1487 = vset.pattern.permute.xlu0 0
        %1488 = vperm.xlu0 %1487, %v1441
        %v1489 = vpop.permute.xlu0 %1488
        %1490 = vset.pattern.permute.xlu0 0
        %1491 = vperm.xlu0 %1490, %v1442
        %v1492 = vpop.permute.xlu0 %1491
        %1493 = vset.pattern.permute.xlu0 0
        %1494 = vperm.xlu0 %1493, %v1443
        %v1495 = vpop.permute.xlu0 %1494
        %1496 = vset.pattern.permute.xlu0 0
        %1497 = vperm.xlu0 %1496, %v1444
        %v1498 = vpop.permute.xlu0 %1497
        %1499 = vset.pattern.permute.xlu0 0
        %1500 = vperm.xlu0 %1499, %v1445
        %v1501 = vpop.permute.xlu0 %1500
        %1502 = vset.pattern.permute.xlu0 0
        %1503 = vperm.xlu0 %1502, %v1446
        %v1504 = vpop.permute.xlu0 %1503
        %1505 = vset.pattern.permute.xlu0 0
        %1506 = vperm.xlu0 %1505, %v1447
        %v1507 = vpop.permute.xlu0 %1506
        %1508 = vset.pattern.permute.xlu0 0
        %1509 = vperm.xlu0 %1508, %v1448
        %v1510 = vpop.permute.xlu0 %1509
        %1511 = vset.pattern.permute.xlu0 0
        %1512 = vperm.xlu0 %1511, %v1449
        %v1513 = vpop.permute.xlu0 %1512
        %v1514 = vlaneseq
        %v1515 = vshrl.u32 %v1514, 7
        %v1516 = vsub.s32 %v1041, %v1515
        %v1517 = vrot.slane %v1468, %v1516
        %v1518 = vlaneseq
        %v1519 = vshrl.u32 %v1518, 7
        %v1520 = vsub.s32 %v1041, %v1519
        %v1521 = vrot.slane %v1471, %v1520
        %v1522 = vlaneseq
        %v1523 = vshrl.u32 %v1522, 7
        %v1524 = vsub.s32 %v1041, %v1523
        %v1525 = vrot.slane %v1474, %v1524
        %v1526 = vlaneseq
        %v1527 = vshrl.u32 %v1526, 7
        %v1528 = vsub.s32 %v1041, %v1527
        %v1529 = vrot.slane %v1477, %v1528
        %v1530 = vlaneseq
        %v1531 = vshrl.u32 %v1530, 7
        %v1532 = vsub.s32 %v1041, %v1531
        %v1533 = vrot.slane %v1480, %v1532
        %v1534 = vlaneseq
        %v1535 = vshrl.u32 %v1534, 7
        %v1536 = vsub.s32 %v1041, %v1535
        %v1537 = vrot.slane %v1483, %v1536
        %v1538 = vlaneseq
        %v1539 = vshrl.u32 %v1538, 7
        %v1540 = vsub.s32 %v1041, %v1539
        %v1541 = vrot.slane %v1486, %v1540
        %v1542 = vlaneseq
        %v1543 = vshrl.u32 %v1542, 7
        %v1544 = vsub.s32 %v1041, %v1543
        %v1545 = vrot.slane %v1489, %v1544
        %v1546 = vlaneseq
        %v1547 = vshrl.u32 %v1546, 7
        %v1548 = vsub.s32 %v1041, %v1547
        %v1549 = vrot.slane %v1492, %v1548
        %v1550 = vlaneseq
        %v1551 = vshrl.u32 %v1550, 7
        %v1552 = vsub.s32 %v1041, %v1551
        %v1553 = vrot.slane %v1495, %v1552
        %v1554 = vlaneseq
        %v1555 = vshrl.u32 %v1554, 7
        %v1556 = vsub.s32 %v1041, %v1555
        %v1557 = vrot.slane %v1498, %v1556
        %v1558 = vlaneseq
        %v1559 = vshrl.u32 %v1558, 7
        %v1560 = vsub.s32 %v1041, %v1559
        %v1561 = vrot.slane %v1501, %v1560
        %v1562 = vlaneseq
        %v1563 = vshrl.u32 %v1562, 7
        %v1564 = vsub.s32 %v1041, %v1563
        %v1565 = vrot.slane %v1504, %v1564
        %v1566 = vlaneseq
        %v1567 = vshrl.u32 %v1566, 7
        %v1568 = vsub.s32 %v1041, %v1567
        %v1569 = vrot.slane %v1507, %v1568
        %v1570 = vlaneseq
        %v1571 = vshrl.u32 %v1570, 7
        %v1572 = vsub.s32 %v1041, %v1571
        %v1573 = vrot.slane %v1510, %v1572
        %v1574 = vlaneseq
        %v1575 = vshrl.u32 %v1574, 7
        %v1576 = vsub.s32 %v1041, %v1575
        %v1577 = vrot.slane %v1513, %v1576
        %v1578 = vsel %vm1074, %v1521, %v1517
        %v1579 = vsel %vm1074, %v1529, %v1525
        %v1580 = vsel %vm1074, %v1537, %v1533
        %v1581 = vsel %vm1074, %v1545, %v1541
        %v1582 = vsel %vm1074, %v1553, %v1549
        %v1583 = vsel %vm1074, %v1561, %v1557
        %v1584 = vsel %vm1074, %v1569, %v1565
        %v1585 = vsel %vm1074, %v1577, %v1573
        %vm1594 = vcmask 58368
        %v1595 = vsel %vm1594, %v1578, -inf
        %1596 = vmax.xlane.f32.xlu0 %v1595
        %v1597 = vpop.xlane.xlu0 %1596
        %v1598 = vsel %vm1594, %v1579, -inf
        %1599 = vmax.xlane.f32.xlu0 %v1598
        %v1600 = vpop.xlane.xlu0 %1599
        %v1601 = vsel %vm1594, %v1580, -inf
        %1602 = vmax.xlane.f32.xlu0 %v1601
        %v1603 = vpop.xlane.xlu0 %1602
        %v1604 = vsel %vm1594, %v1581, -inf
        %1605 = vmax.xlane.f32.xlu0 %v1604
        %v1606 = vpop.xlane.xlu0 %1605
        %v1607 = vsel %vm1594, %v1582, -inf
        %1608 = vmax.xlane.f32.xlu0 %v1607
        %v1609 = vpop.xlane.xlu0 %1608
        %v1610 = vsel %vm1594, %v1583, -inf
        %1611 = vmax.xlane.f32.xlu0 %v1610
        %v1612 = vpop.xlane.xlu0 %1611
        %v1613 = vsel %vm1594, %v1584, -inf
        %1614 = vmax.xlane.f32.xlu0 %v1613
        %v1615 = vpop.xlane.xlu0 %1614
        %v1616 = vsel %vm1594, %v1585, -inf
        %1617 = vmax.xlane.f32.xlu0 %v1616
        %v1618 = vpop.xlane.xlu0 %1617
        %v1627 = vlaneseq
        %v1628 = vshrl.u32 %v1627, 7
        %v1629 = vsub.s32 0, %v1628
        %v1630 = vrot.slane %v1597, %v1629
        %v1631 = vlaneseq
        %v1632 = vshrl.u32 %v1631, 7
        %v1633 = vsub.s32 1, %v1632
        %v1634 = vrot.slane %v1597, %v1633
        %v1635 = vlaneseq
        %v1636 = vshrl.u32 %v1635, 7
        %v1637 = vsub.s32 0, %v1636
        %v1638 = vrot.slane %v1600, %v1637
        %v1639 = vlaneseq
        %v1640 = vshrl.u32 %v1639, 7
        %v1641 = vsub.s32 1, %v1640
        %v1642 = vrot.slane %v1600, %v1641
        %v1643 = vlaneseq
        %v1644 = vshrl.u32 %v1643, 7
        %v1645 = vsub.s32 0, %v1644
        %v1646 = vrot.slane %v1603, %v1645
        %v1647 = vlaneseq
        %v1648 = vshrl.u32 %v1647, 7
        %v1649 = vsub.s32 1, %v1648
        %v1650 = vrot.slane %v1603, %v1649
        %v1651 = vlaneseq
        %v1652 = vshrl.u32 %v1651, 7
        %v1653 = vsub.s32 0, %v1652
        %v1654 = vrot.slane %v1606, %v1653
        %v1655 = vlaneseq
        %v1656 = vshrl.u32 %v1655, 7
        %v1657 = vsub.s32 1, %v1656
        %v1658 = vrot.slane %v1606, %v1657
        %v1659 = vlaneseq
        %v1660 = vshrl.u32 %v1659, 7
        %v1661 = vsub.s32 0, %v1660
        %v1662 = vrot.slane %v1609, %v1661
        %v1663 = vlaneseq
        %v1664 = vshrl.u32 %v1663, 7
        %v1665 = vsub.s32 1, %v1664
        %v1666 = vrot.slane %v1609, %v1665
        %v1667 = vlaneseq
        %v1668 = vshrl.u32 %v1667, 7
        %v1669 = vsub.s32 0, %v1668
        %v1670 = vrot.slane %v1612, %v1669
        %v1671 = vlaneseq
        %v1672 = vshrl.u32 %v1671, 7
        %v1673 = vsub.s32 1, %v1672
        %v1674 = vrot.slane %v1612, %v1673
        %v1675 = vlaneseq
        %v1676 = vshrl.u32 %v1675, 7
        %v1677 = vsub.s32 0, %v1676
        %v1678 = vrot.slane %v1615, %v1677
        %v1679 = vlaneseq
        %v1680 = vshrl.u32 %v1679, 7
        %v1681 = vsub.s32 1, %v1680
        %v1682 = vrot.slane %v1615, %v1681
        %v1683 = vlaneseq
        %v1684 = vshrl.u32 %v1683, 7
        %v1685 = vsub.s32 0, %v1684
        %v1686 = vrot.slane %v1618, %v1685
        %v1687 = vlaneseq
        %v1688 = vshrl.u32 %v1687, 7
        %v1689 = vsub.s32 1, %v1688
        %v1690 = vrot.slane %v1618, %v1689
        %v1707 = vsub.f32 %v1434, %v1630
        %v1708 = vsub.f32 %v1435, %v1634
        %v1709 = vsub.f32 %v1436, %v1638
        %v1710 = vsub.f32 %v1437, %v1642
        %v1711 = vsub.f32 %v1438, %v1646
        %v1712 = vsub.f32 %v1439, %v1650
        %v1713 = vsub.f32 %v1440, %v1654
        %v1714 = vsub.f32 %v1441, %v1658
        %v1715 = vsub.f32 %v1442, %v1662
        %v1716 = vsub.f32 %v1443, %v1666
        %v1717 = vsub.f32 %v1444, %v1670
        %v1718 = vsub.f32 %v1445, %v1674
        %v1719 = vsub.f32 %v1446, %v1678
        %v1720 = vsub.f32 %v1447, %v1682
        %v1721 = vsub.f32 %v1448, %v1686
        %v1722 = vsub.f32 %v1449, %v1690
        %v1723 = vmul.f32 %v1707, 1.442695
        %v1724 = vpow.pop %v1723
        %v1725 = vmul.f32 %v1708, 1.442695
        %v1726 = vpow.pop %v1725
        %v1727 = vmul.f32 %v1709, 1.442695
        %v1728 = vpow.pop %v1727
        %v1729 = vmul.f32 %v1710, 1.442695
        %v1730 = vpow.pop %v1729
        %v1731 = vmul.f32 %v1711, 1.442695
        %v1732 = vpow.pop %v1731
        %v1733 = vmul.f32 %v1712, 1.442695
        %v1734 = vpow.pop %v1733
        %v1735 = vmul.f32 %v1713, 1.442695
        %v1736 = vpow.pop %v1735
        %v1737 = vmul.f32 %v1714, 1.442695
        %v1738 = vpow.pop %v1737
        %v1739 = vmul.f32 %v1715, 1.442695
        %v1740 = vpow.pop %v1739
        %v1741 = vmul.f32 %v1716, 1.442695
        %v1742 = vpow.pop %v1741
        %v1743 = vmul.f32 %v1717, 1.442695
        %v1744 = vpow.pop %v1743
        %v1745 = vmul.f32 %v1718, 1.442695
        %v1746 = vpow.pop %v1745
        %v1747 = vmul.f32 %v1719, 1.442695
        %v1748 = vpow.pop %v1747
        %v1749 = vmul.f32 %v1720, 1.442695
        %v1750 = vpow.pop %v1749
        %v1751 = vmul.f32 %v1721, 1.442695
        %v1752 = vpow.pop %v1751
        %v1753 = vmul.f32 %v1722, 1.442695
        %v1754 = vpow.pop %v1753
        %1771 = vset.pattern.permute.xlu0 0
        %1772 = vperm.xlu0 %1771, %v1724
        %v1773 = vpop.permute.xlu0 %1772
        %1774 = vset.pattern.permute.xlu0 0
        %1775 = vperm.xlu0 %1774, %v1726
        %v1776 = vpop.permute.xlu0 %1775
        %1777 = vset.pattern.permute.xlu0 0
        %1778 = vperm.xlu0 %1777, %v1728
        %v1779 = vpop.permute.xlu0 %1778
        %1780 = vset.pattern.permute.xlu0 0
        %1781 = vperm.xlu0 %1780, %v1730
        %v1782 = vpop.permute.xlu0 %1781
        %1783 = vset.pattern.permute.xlu0 0
        %1784 = vperm.xlu0 %1783, %v1732
        %v1785 = vpop.permute.xlu0 %1784
        %1786 = vset.pattern.permute.xlu0 0
        %1787 = vperm.xlu0 %1786, %v1734
        %v1788 = vpop.permute.xlu0 %1787
        %1789 = vset.pattern.permute.xlu0 0
        %1790 = vperm.xlu0 %1789, %v1736
        %v1791 = vpop.permute.xlu0 %1790
        %1792 = vset.pattern.permute.xlu0 0
        %1793 = vperm.xlu0 %1792, %v1738
        %v1794 = vpop.permute.xlu0 %1793
        %1795 = vset.pattern.permute.xlu0 0
        %1796 = vperm.xlu0 %1795, %v1740
        %v1797 = vpop.permute.xlu0 %1796
        %1798 = vset.pattern.permute.xlu0 0
        %1799 = vperm.xlu0 %1798, %v1742
        %v1800 = vpop.permute.xlu0 %1799
        %1801 = vset.pattern.permute.xlu0 0
        %1802 = vperm.xlu0 %1801, %v1744
        %v1803 = vpop.permute.xlu0 %1802
        %1804 = vset.pattern.permute.xlu0 0
        %1805 = vperm.xlu0 %1804, %v1746
        %v1806 = vpop.permute.xlu0 %1805
        %1807 = vset.pattern.permute.xlu0 0
        %1808 = vperm.xlu0 %1807, %v1748
        %v1809 = vpop.permute.xlu0 %1808
        %1810 = vset.pattern.permute.xlu0 0
        %1811 = vperm.xlu0 %1810, %v1750
        %v1812 = vpop.permute.xlu0 %1811
        %1813 = vset.pattern.permute.xlu0 0
        %1814 = vperm.xlu0 %1813, %v1752
        %v1815 = vpop.permute.xlu0 %1814
        %1816 = vset.pattern.permute.xlu0 0
        %1817 = vperm.xlu0 %1816, %v1754
        %v1818 = vpop.permute.xlu0 %1817
        %v1819 = vlaneseq
        %v1820 = vshrl.u32 %v1819, 7
        %v1821 = vsub.s32 %v1041, %v1820
        %v1822 = vrot.slane %v1773, %v1821
        %v1823 = vlaneseq
        %v1824 = vshrl.u32 %v1823, 7
        %v1825 = vsub.s32 %v1041, %v1824
        %v1826 = vrot.slane %v1776, %v1825
        %v1827 = vlaneseq
        %v1828 = vshrl.u32 %v1827, 7
        %v1829 = vsub.s32 %v1041, %v1828
        %v1830 = vrot.slane %v1779, %v1829
        %v1831 = vlaneseq
        %v1832 = vshrl.u32 %v1831, 7
        %v1833 = vsub.s32 %v1041, %v1832
        %v1834 = vrot.slane %v1782, %v1833
        %v1835 = vlaneseq
        %v1836 = vshrl.u32 %v1835, 7
        %v1837 = vsub.s32 %v1041, %v1836
        %v1838 = vrot.slane %v1785, %v1837
        %v1839 = vlaneseq
        %v1840 = vshrl.u32 %v1839, 7
        %v1841 = vsub.s32 %v1041, %v1840
        %v1842 = vrot.slane %v1788, %v1841
        %v1843 = vlaneseq
        %v1844 = vshrl.u32 %v1843, 7
        %v1845 = vsub.s32 %v1041, %v1844
        %v1846 = vrot.slane %v1791, %v1845
        %v1847 = vlaneseq
        %v1848 = vshrl.u32 %v1847, 7
        %v1849 = vsub.s32 %v1041, %v1848
        %v1850 = vrot.slane %v1794, %v1849
        %v1851 = vlaneseq
        %v1852 = vshrl.u32 %v1851, 7
        %v1853 = vsub.s32 %v1041, %v1852
        %v1854 = vrot.slane %v1797, %v1853
        %v1855 = vlaneseq
        %v1856 = vshrl.u32 %v1855, 7
        %v1857 = vsub.s32 %v1041, %v1856
        %v1858 = vrot.slane %v1800, %v1857
        %v1859 = vlaneseq
        %v1860 = vshrl.u32 %v1859, 7
        %v1861 = vsub.s32 %v1041, %v1860
        %v1862 = vrot.slane %v1803, %v1861
        %v1863 = vlaneseq
        %v1864 = vshrl.u32 %v1863, 7
        %v1865 = vsub.s32 %v1041, %v1864
        %v1866 = vrot.slane %v1806, %v1865
        %v1867 = vlaneseq
        %v1868 = vshrl.u32 %v1867, 7
        %v1869 = vsub.s32 %v1041, %v1868
        %v1870 = vrot.slane %v1809, %v1869
        %v1871 = vlaneseq
        %v1872 = vshrl.u32 %v1871, 7
        %v1873 = vsub.s32 %v1041, %v1872
        %v1874 = vrot.slane %v1812, %v1873
        %v1875 = vlaneseq
        %v1876 = vshrl.u32 %v1875, 7
        %v1877 = vsub.s32 %v1041, %v1876
        %v1878 = vrot.slane %v1815, %v1877
        %v1879 = vlaneseq
        %v1880 = vshrl.u32 %v1879, 7
        %v1881 = vsub.s32 %v1041, %v1880
        %v1882 = vrot.slane %v1818, %v1881
        %v1883 = vsel %vm1074, %v1826, %v1822
        %v1884 = vsel %vm1074, %v1834, %v1830
        %v1885 = vsel %vm1074, %v1842, %v1838
        %v1886 = vsel %vm1074, %v1850, %v1846
        %v1887 = vsel %vm1074, %v1858, %v1854
        %v1888 = vsel %vm1074, %v1866, %v1862
        %v1889 = vsel %vm1074, %v1874, %v1870
        %v1890 = vsel %vm1074, %v1882, %v1878
        %v1899 = vsel %vm1594, %v1883, 0.0
        %1900 = vadd.xlane.f32.xlu0 %v1899
        %v1901 = vpop.xlane.xlu0 %1900
        %v1902 = vsel %vm1594, %v1884, 0.0
        %1903 = vadd.xlane.f32.xlu0 %v1902
        %v1904 = vpop.xlane.xlu0 %1903
        %v1905 = vsel %vm1594, %v1885, 0.0
        %1906 = vadd.xlane.f32.xlu0 %v1905
        %v1907 = vpop.xlane.xlu0 %1906
        %v1908 = vsel %vm1594, %v1886, 0.0
        %1909 = vadd.xlane.f32.xlu0 %v1908
        %v1910 = vpop.xlane.xlu0 %1909
        %v1911 = vsel %vm1594, %v1887, 0.0
        %1912 = vadd.xlane.f32.xlu0 %v1911
        %v1913 = vpop.xlane.xlu0 %1912
        %v1914 = vsel %vm1594, %v1888, 0.0
        %1915 = vadd.xlane.f32.xlu0 %v1914
        %v1916 = vpop.xlane.xlu0 %1915
        %v1917 = vsel %vm1594, %v1889, 0.0
        %1918 = vadd.xlane.f32.xlu0 %v1917
        %v1919 = vpop.xlane.xlu0 %1918
        %v1920 = vsel %vm1594, %v1890, 0.0
        %1921 = vadd.xlane.f32.xlu0 %v1920
        %v1922 = vpop.xlane.xlu0 %1921
        %v1931 = vlaneseq
        %v1932 = vshrl.u32 %v1931, 7
        %v1933 = vsub.s32 0, %v1932
        %v1934 = vrot.slane %v1901, %v1933
        %v1935 = vlaneseq
        %v1936 = vshrl.u32 %v1935, 7
        %v1937 = vsub.s32 1, %v1936
        %v1938 = vrot.slane %v1901, %v1937
        %v1939 = vlaneseq
        %v1940 = vshrl.u32 %v1939, 7
        %v1941 = vsub.s32 0, %v1940
        %v1942 = vrot.slane %v1904, %v1941
        %v1943 = vlaneseq
        %v1944 = vshrl.u32 %v1943, 7
        %v1945 = vsub.s32 1, %v1944
        %v1946 = vrot.slane %v1904, %v1945
        %v1947 = vlaneseq
        %v1948 = vshrl.u32 %v1947, 7
        %v1949 = vsub.s32 0, %v1948
        %v1950 = vrot.slane %v1907, %v1949
        %v1951 = vlaneseq
        %v1952 = vshrl.u32 %v1951, 7
        %v1953 = vsub.s32 1, %v1952
        %v1954 = vrot.slane %v1907, %v1953
        %v1955 = vlaneseq
        %v1956 = vshrl.u32 %v1955, 7
        %v1957 = vsub.s32 0, %v1956
        %v1958 = vrot.slane %v1910, %v1957
        %v1959 = vlaneseq
        %v1960 = vshrl.u32 %v1959, 7
        %v1961 = vsub.s32 1, %v1960
        %v1962 = vrot.slane %v1910, %v1961
        %v1963 = vlaneseq
        %v1964 = vshrl.u32 %v1963, 7
        %v1965 = vsub.s32 0, %v1964
        %v1966 = vrot.slane %v1913, %v1965
        %v1967 = vlaneseq
        %v1968 = vshrl.u32 %v1967, 7
        %v1969 = vsub.s32 1, %v1968
        %v1970 = vrot.slane %v1913, %v1969
        %v1971 = vlaneseq
        %v1972 = vshrl.u32 %v1971, 7
        %v1973 = vsub.s32 0, %v1972
        %v1974 = vrot.slane %v1916, %v1973
        %v1975 = vlaneseq
        %v1976 = vshrl.u32 %v1975, 7
        %v1977 = vsub.s32 1, %v1976
        %v1978 = vrot.slane %v1916, %v1977
        %v1979 = vlaneseq
        %v1980 = vshrl.u32 %v1979, 7
        %v1981 = vsub.s32 0, %v1980
        %v1982 = vrot.slane %v1919, %v1981
        %v1983 = vlaneseq
        %v1984 = vshrl.u32 %v1983, 7
        %v1985 = vsub.s32 1, %v1984
        %v1986 = vrot.slane %v1919, %v1985
        %v1987 = vlaneseq
        %v1988 = vshrl.u32 %v1987, 7
        %v1989 = vsub.s32 0, %v1988
        %v1990 = vrot.slane %v1922, %v1989
        %v1991 = vlaneseq
        %v1992 = vshrl.u32 %v1991, 7
        %v1993 = vsub.s32 1, %v1992
        %v1994 = vrot.slane %v1922, %v1993
        %v2011 = vrcp.pop %v1934
        %v2012 = vmul.f32 %v1724, %v2011
        %v2013 = vrcp.pop %v1938
        %v2014 = vmul.f32 %v1726, %v2013
        %v2015 = vrcp.pop %v1942
        %v2016 = vmul.f32 %v1728, %v2015
        %v2017 = vrcp.pop %v1946
        %v2018 = vmul.f32 %v1730, %v2017
        %v2019 = vrcp.pop %v1950
        %v2020 = vmul.f32 %v1732, %v2019
        %v2021 = vrcp.pop %v1954
        %v2022 = vmul.f32 %v1734, %v2021
        %v2023 = vrcp.pop %v1958
        %v2024 = vmul.f32 %v1736, %v2023
        %v2025 = vrcp.pop %v1962
        %v2026 = vmul.f32 %v1738, %v2025
        %v2027 = vrcp.pop %v1966
        %v2028 = vmul.f32 %v1740, %v2027
        %v2029 = vrcp.pop %v1970
        %v2030 = vmul.f32 %v1742, %v2029
        %v2031 = vrcp.pop %v1974
        %v2032 = vmul.f32 %v1744, %v2031
        %v2033 = vrcp.pop %v1978
        %v2034 = vmul.f32 %v1746, %v2033
        %v2035 = vrcp.pop %v1982
        %v2036 = vmul.f32 %v1748, %v2035
        %v2037 = vrcp.pop %v1986
        %v2038 = vmul.f32 %v1750, %v2037
        %v2039 = vrcp.pop %v1990
        %v2040 = vmul.f32 %v1752, %v2039
        %v2041 = vrcp.pop %v1994
        %v2042 = vmul.f32 %v1754, %v2041
        %v2043 = vld [vmem:[%s467] sm:$0xff]
        %v2044 = vld [vmem:[%s467 + $0x8] sm:$0xff]
        %v2045 = vld [vmem:[%s467 + $0x10] sm:$0xff]
        %v2046 = vld [vmem:[%s467 + $0x18] sm:$0xff]
        %v2047 = vld [vmem:[%s467 + $0x20] sm:$0xff]
        %v2048 = vld [vmem:[%s467 + $0x28] sm:$0xff]
        %v2049 = vld [vmem:[%s467 + $0x30] sm:$0xff]
        %v2050 = vld [vmem:[%s467 + $0x38] sm:$0xff]
        %2053 = vset.pattern.permute.xlu0 0
        %2054 = vperm.xlu0 %2053, %v2012
        %v2055 = vpop.permute.xlu0 %2054
        %2056 = vset.pattern.permute.xlu0 0
        %2057 = vperm.xlu0 %2056, %v2014
        %v2058 = vpop.permute.xlu0 %2057
        %v2059 = vlaneseq
        %v2060 = vshrl.u32 %v2059, 7
        %v2061 = vsub.s32 %v1041, %v2060
        %v2062 = vrot.slane %v2055, %v2061
        %v2063 = vlaneseq
        %v2064 = vshrl.u32 %v2063, 7
        %v2065 = vsub.s32 %v1041, %v2064
        %v2066 = vrot.slane %v2058, %v2065
        %v2067 = vsel %vm1074, %v2066, %v2062
        %v2068 = vsel %vm1089, %v2067, 0
        %2070 = vmatprep.subr.mxu0 0.0
        %2071 = vmatpush1.msra.mxu0 %v2043
        %2072 = vmatprep.subr.mxu0 0.0
        %2073 = vmatpush1.msra.mxu0 0.0
        %2074 = vmatprep.subr.mxu0 0.0
        %2075 = vmatpush1.msra.mxu0 0.0
        %2076 = vmatprep.subr.mxu0 0.0
        %2077 = vmatpush1.msra.mxu0 0.0
        %2078 = vmatprep.subr.mxu0 0.0
        %2079 = vmatpush1.msra.mxu0 0.0
        %2080 = vmatprep.subr.mxu0 0.0
        %2081 = vmatpush1.msra.mxu0 0.0
        %2082 = vmatprep.subr.mxu0 0.0
        %2083 = vmatpush1.msra.mxu0 0.0
        %2084 = vmatprep.subr.mxu0 0.0
        %2085 = vmatpush1.msra.mxu0 0.0
        %2086 = vmatprep.subr.mxu0 0.0
        %2087 = vmatpush1.msra.mxu0 0.0
        %2088 = vmatprep.subr.mxu0 0.0
        %2089 = vmatpush1.msra.mxu0 0.0
        %2090 = vmatprep.subr.mxu0 0.0
        %2091 = vmatpush1.msra.mxu0 0.0
        %2092 = vmatprep.subr.mxu0 0.0
        %2093 = vmatpush1.msra.mxu0 0.0
        %2094 = vmatprep.subr.mxu0 0.0
        %2095 = vmatpush1.msra.mxu0 0.0
        %2096 = vmatprep.subr.mxu0 0.0
        %2097 = vmatpush1.msra.mxu0 0.0
        %2098 = vmatprep.subr.mxu0 0.0
        %2099 = vmatpush1.msra.mxu0 0.0
        %2100 = vmatprep.subr.mxu0 0.0
        %2101 = vmatpush1.msra.mxu0 0.0
        %2102 = vmatprep.subr.mxu0 0.0
        %2103 = vmatpush1.msra.mxu0 0.0
        %2104 = vmatprep.subr.mxu0 0.0
        %2105 = vmatpush1.msra.mxu0 0.0
        %2106 = vmatprep.subr.mxu0 0.0
        %2107 = vmatpush1.msra.mxu0 0.0
        %2108 = vmatprep.subr.mxu0 0.0
        %2109 = vmatpush1.msra.mxu0 0.0
        %2110 = vmatprep.subr.mxu0 0.0
        %2111 = vmatpush1.msra.mxu0 0.0
        %2112 = vmatprep.subr.mxu0 0.0
        %2113 = vmatpush1.msra.mxu0 0.0
        %2114 = vmatprep.subr.mxu0 0.0
        %2115 = vmatpush1.msra.mxu0 0.0
        %2116 = vmatprep.subr.mxu0 0.0
        %2117 = vmatpush1.msra.mxu0 0.0
        %2118 = vmatprep.subr.mxu0 0.0
        %2119 = vmatpush1.msra.mxu0 0.0
        %2120 = vmatprep.subr.mxu0 0.0
        %2121 = vmatpush1.msra.mxu0 0.0
        %2122 = vmatprep.subr.mxu0 0.0
        %2123 = vmatpush1.msra.mxu0 0.0
        %2124 = vmatprep.subr.mxu0 0.0
        %2125 = vmatpush1.msra.mxu0 0.0
        %2126 = vmatprep.subr.mxu0 0.0
        %2127 = vmatpush1.msra.mxu0 0.0
        %2128 = vmatprep.subr.mxu0 0.0
        %2129 = vmatpush1.msra.mxu0 0.0
        %2130 = vmatprep.subr.mxu0 0.0
        %2131 = vmatpush1.msra.mxu0 0.0
        %2132 = vmatprep.subr.mxu0 0.0
        %2133 = vmatpush1.msra.mxu0 0.0
        %2134 = vmatprep.mubr.f32.mxu0 0.0
        %2135 = vmatmul.mubr.f32.gmra.mrb[0].mxu0 %v2068
        %v2136 = vpop.f32.mrb[0].mxu0
        %v2137 = vadd.f32 0.0, %v2136
        %v2138 = vpop.f32.mrb[0].mxu0
        %2139 = vdwg.mxu0
        %2142 = vset.pattern.permute.xlu0 0
        %2143 = vperm.xlu0 %2142, %v2016
        %v2144 = vpop.permute.xlu0 %2143
        %2145 = vset.pattern.permute.xlu0 0
        %2146 = vperm.xlu0 %2145, %v2018
        %v2147 = vpop.permute.xlu0 %2146
        %v2148 = vlaneseq
        %v2149 = vshrl.u32 %v2148, 7
        %v2150 = vsub.s32 %v1041, %v2149
        %v2151 = vrot.slane %v2144, %v2150
        %v2152 = vlaneseq
        %v2153 = vshrl.u32 %v2152, 7
        %v2154 = vsub.s32 %v1041, %v2153
        %v2155 = vrot.slane %v2147, %v2154
        %v2156 = vsel %vm1074, %v2155, %v2151
        %v2157 = vsel %vm1089, %v2156, 0
        %2159 = vmatprep.subr.mxu0 0.0
        %2160 = vmatpush1.msra.mxu0 %v2044
        %2161 = vmatprep.subr.mxu0 0.0
        %2162 = vmatpush1.msra.mxu0 0.0
        %2163 = vmatprep.subr.mxu0 0.0
        %2164 = vmatpush1.msra.mxu0 0.0
        %2165 = vmatprep.subr.mxu0 0.0
        %2166 = vmatpush1.msra.mxu0 0.0
        %2167 = vmatprep.subr.mxu0 0.0
        %2168 = vmatpush1.msra.mxu0 0.0
        %2169 = vmatprep.subr.mxu0 0.0
        %2170 = vmatpush1.msra.mxu0 0.0
        %2171 = vmatprep.subr.mxu0 0.0
        %2172 = vmatpush1.msra.mxu0 0.0
        %2173 = vmatprep.subr.mxu0 0.0
        %2174 = vmatpush1.msra.mxu0 0.0
        %2175 = vmatprep.subr.mxu0 0.0
        %2176 = vmatpush1.msra.mxu0 0.0
        %2177 = vmatprep.subr.mxu0 0.0
        %2178 = vmatpush1.msra.mxu0 0.0
        %2179 = vmatprep.subr.mxu0 0.0
        %2180 = vmatpush1.msra.mxu0 0.0
        %2181 = vmatprep.subr.mxu0 0.0
        %2182 = vmatpush1.msra.mxu0 0.0
        %2183 = vmatprep.subr.mxu0 0.0
        %2184 = vmatpush1.msra.mxu0 0.0
        %2185 = vmatprep.subr.mxu0 0.0
        %2186 = vmatpush1.msra.mxu0 0.0
        %2187 = vmatprep.subr.mxu0 0.0
        %2188 = vmatpush1.msra.mxu0 0.0
        %2189 = vmatprep.subr.mxu0 0.0
        %2190 = vmatpush1.msra.mxu0 0.0
        %2191 = vmatprep.subr.mxu0 0.0
        %2192 = vmatpush1.msra.mxu0 0.0
        %2193 = vmatprep.subr.mxu0 0.0
        %2194 = vmatpush1.msra.mxu0 0.0
        %2195 = vmatprep.subr.mxu0 0.0
        %2196 = vmatpush1.msra.mxu0 0.0
        %2197 = vmatprep.subr.mxu0 0.0
        %2198 = vmatpush1.msra.mxu0 0.0
        %2199 = vmatprep.subr.mxu0 0.0
        %2200 = vmatpush1.msra.mxu0 0.0
        %2201 = vmatprep.subr.mxu0 0.0
        %2202 = vmatpush1.msra.mxu0 0.0
        %2203 = vmatprep.subr.mxu0 0.0
        %2204 = vmatpush1.msra.mxu0 0.0
        %2205 = vmatprep.subr.mxu0 0.0
        %2206 = vmatpush1.msra.mxu0 0.0
        %2207 = vmatprep.subr.mxu0 0.0
        %2208 = vmatpush1.msra.mxu0 0.0
        %2209 = vmatprep.subr.mxu0 0.0
        %2210 = vmatpush1.msra.mxu0 0.0
        %2211 = vmatprep.subr.mxu0 0.0
        %2212 = vmatpush1.msra.mxu0 0.0
        %2213 = vmatprep.subr.mxu0 0.0
        %2214 = vmatpush1.msra.mxu0 0.0
        %2215 = vmatprep.subr.mxu0 0.0
        %2216 = vmatpush1.msra.mxu0 0.0
        %2217 = vmatprep.subr.mxu0 0.0
        %2218 = vmatpush1.msra.mxu0 0.0
        %2219 = vmatprep.subr.mxu0 0.0
        %2220 = vmatpush1.msra.mxu0 0.0
        %2221 = vmatprep.subr.mxu0 0.0
        %2222 = vmatpush1.msra.mxu0 0.0
        %2223 = vmatprep.mubr.f32.mxu0 0.0
        %2224 = vmatmul.mubr.f32.gmra.mrb[0].mxu0 %v2157
        %v2225 = vpop.f32.mrb[0].mxu0
        %v2226 = vadd.f32 0.0, %v2225
        %v2227 = vpop.f32.mrb[0].mxu0
        %2228 = vdwg.mxu0
        %2231 = vset.pattern.permute.xlu0 0
        %2232 = vperm.xlu0 %2231, %v2020
        %v2233 = vpop.permute.xlu0 %2232
        %2234 = vset.pattern.permute.xlu0 0
        %2235 = vperm.xlu0 %2234, %v2022
        %v2236 = vpop.permute.xlu0 %2235
        %v2237 = vlaneseq
        %v2238 = vshrl.u32 %v2237, 7
        %v2239 = vsub.s32 %v1041, %v2238
        %v2240 = vrot.slane %v2233, %v2239
        %v2241 = vlaneseq
        %v2242 = vshrl.u32 %v2241, 7
        %v2243 = vsub.s32 %v1041, %v2242
        %v2244 = vrot.slane %v2236, %v2243
        %v2245 = vsel %vm1074, %v2244, %v2240
        %v2246 = vsel %vm1089, %v2245, 0
        %2248 = vmatprep.subr.mxu0 0.0
        %2249 = vmatpush1.msra.mxu0 %v2045
        %2250 = vmatprep.subr.mxu0 0.0
        %2251 = vmatpush1.msra.mxu0 0.0
        %2252 = vmatprep.subr.mxu0 0.0
        %2253 = vmatpush1.msra.mxu0 0.0
        %2254 = vmatprep.subr.mxu0 0.0
        %2255 = vmatpush1.msra.mxu0 0.0
        %2256 = vmatprep.subr.mxu0 0.0
        %2257 = vmatpush1.msra.mxu0 0.0
        %2258 = vmatprep.subr.mxu0 0.0
        %2259 = vmatpush1.msra.mxu0 0.0
        %2260 = vmatprep.subr.mxu0 0.0
        %2261 = vmatpush1.msra.mxu0 0.0
        %2262 = vmatprep.subr.mxu0 0.0
        %2263 = vmatpush1.msra.mxu0 0.0
        %2264 = vmatprep.subr.mxu0 0.0
        %2265 = vmatpush1.msra.mxu0 0.0
        %2266 = vmatprep.subr.mxu0 0.0
        %2267 = vmatpush1.msra.mxu0 0.0
        %2268 = vmatprep.subr.mxu0 0.0
        %2269 = vmatpush1.msra.mxu0 0.0
        %2270 = vmatprep.subr.mxu0 0.0
        %2271 = vmatpush1.msra.mxu0 0.0
        %2272 = vmatprep.subr.mxu0 0.0
        %2273 = vmatpush1.msra.mxu0 0.0
        %2274 = vmatprep.subr.mxu0 0.0
        %2275 = vmatpush1.msra.mxu0 0.0
        %2276 = vmatprep.subr.mxu0 0.0
        %2277 = vmatpush1.msra.mxu0 0.0
        %2278 = vmatprep.subr.mxu0 0.0
        %2279 = vmatpush1.msra.mxu0 0.0
        %2280 = vmatprep.subr.mxu0 0.0
        %2281 = vmatpush1.msra.mxu0 0.0
        %2282 = vmatprep.subr.mxu0 0.0
        %2283 = vmatpush1.msra.mxu0 0.0
        %2284 = vmatprep.subr.mxu0 0.0
        %2285 = vmatpush1.msra.mxu0 0.0
        %2286 = vmatprep.subr.mxu0 0.0
        %2287 = vmatpush1.msra.mxu0 0.0
        %2288 = vmatprep.subr.mxu0 0.0
        %2289 = vmatpush1.msra.mxu0 0.0
        %2290 = vmatprep.subr.mxu0 0.0
        %2291 = vmatpush1.msra.mxu0 0.0
        %2292 = vmatprep.subr.mxu0 0.0
        %2293 = vmatpush1.msra.mxu0 0.0
        %2294 = vmatprep.subr.mxu0 0.0
        %2295 = vmatpush1.msra.mxu0 0.0
        %2296 = vmatprep.subr.mxu0 0.0
        %2297 = vmatpush1.msra.mxu0 0.0
        %2298 = vmatprep.subr.mxu0 0.0
        %2299 = vmatpush1.msra.mxu0 0.0
        %2300 = vmatprep.subr.mxu0 0.0
        %2301 = vmatpush1.msra.mxu0 0.0
        %2302 = vmatprep.subr.mxu0 0.0
        %2303 = vmatpush1.msra.mxu0 0.0
        %2304 = vmatprep.subr.mxu0 0.0
        %2305 = vmatpush1.msra.mxu0 0.0
        %2306 = vmatprep.subr.mxu0 0.0
        %2307 = vmatpush1.msra.mxu0 0.0
        %2308 = vmatprep.subr.mxu0 0.0
        %2309 = vmatpush1.msra.mxu0 0.0
        %2310 = vmatprep.subr.mxu0 0.0
        %2311 = vmatpush1.msra.mxu0 0.0
        %2312 = vmatprep.mubr.f32.mxu0 0.0
        %2313 = vmatmul.mubr.f32.gmra.mrb[0].mxu0 %v2246
        %v2314 = vpop.f32.mrb[0].mxu0
        %v2315 = vadd.f32 0.0, %v2314
        %v2316 = vpop.f32.mrb[0].mxu0
        %2317 = vdwg.mxu0
        %2320 = vset.pattern.permute.xlu0 0
        %2321 = vperm.xlu0 %2320, %v2024
        %v2322 = vpop.permute.xlu0 %2321
        %2323 = vset.pattern.permute.xlu0 0
        %2324 = vperm.xlu0 %2323, %v2026
        %v2325 = vpop.permute.xlu0 %2324
        %v2326 = vlaneseq
        %v2327 = vshrl.u32 %v2326, 7
        %v2328 = vsub.s32 %v1041, %v2327
        %v2329 = vrot.slane %v2322, %v2328
        %v2330 = vlaneseq
        %v2331 = vshrl.u32 %v2330, 7
        %v2332 = vsub.s32 %v1041, %v2331
        %v2333 = vrot.slane %v2325, %v2332
        %v2334 = vsel %vm1074, %v2333, %v2329
        %v2335 = vsel %vm1089, %v2334, 0
        %2337 = vmatprep.subr.mxu0 0.0
        %2338 = vmatpush1.msra.mxu0 %v2046
        %2339 = vmatprep.subr.mxu0 0.0
        %2340 = vmatpush1.msra.mxu0 0.0
        %2341 = vmatprep.subr.mxu0 0.0
        %2342 = vmatpush1.msra.mxu0 0.0
        %2343 = vmatprep.subr.mxu0 0.0
        %2344 = vmatpush1.msra.mxu0 0.0
        %2345 = vmatprep.subr.mxu0 0.0
        %2346 = vmatpush1.msra.mxu0 0.0
        %2347 = vmatprep.subr.mxu0 0.0
        %2348 = vmatpush1.msra.mxu0 0.0
        %2349 = vmatprep.subr.mxu0 0.0
        %2350 = vmatpush1.msra.mxu0 0.0
        %2351 = vmatprep.subr.mxu0 0.0
        %2352 = vmatpush1.msra.mxu0 0.0
        %2353 = vmatprep.subr.mxu0 0.0
        %2354 = vmatpush1.msra.mxu0 0.0
        %2355 = vmatprep.subr.mxu0 0.0
        %2356 = vmatpush1.msra.mxu0 0.0
        %2357 = vmatprep.subr.mxu0 0.0
        %2358 = vmatpush1.msra.mxu0 0.0
        %2359 = vmatprep.subr.mxu0 0.0
        %2360 = vmatpush1.msra.mxu0 0.0
        %2361 = vmatprep.subr.mxu0 0.0
        %2362 = vmatpush1.msra.mxu0 0.0
        %2363 = vmatprep.subr.mxu0 0.0
        %2364 = vmatpush1.msra.mxu0 0.0
        %2365 = vmatprep.subr.mxu0 0.0
        %2366 = vmatpush1.msra.mxu0 0.0
        %2367 = vmatprep.subr.mxu0 0.0
        %2368 = vmatpush1.msra.mxu0 0.0
        %2369 = vmatprep.subr.mxu0 0.0
        %2370 = vmatpush1.msra.mxu0 0.0
        %2371 = vmatprep.subr.mxu0 0.0
        %2372 = vmatpush1.msra.mxu0 0.0
        %2373 = vmatprep.subr.mxu0 0.0
        %2374 = vmatpush1.msra.mxu0 0.0
        %2375 = vmatprep.subr.mxu0 0.0
        %2376 = vmatpush1.msra.mxu0 0.0
        %2377 = vmatprep.subr.mxu0 0.0
        %2378 = vmatpush1.msra.mxu0 0.0
        %2379 = vmatprep.subr.mxu0 0.0
        %2380 = vmatpush1.msra.mxu0 0.0
        %2381 = vmatprep.subr.mxu0 0.0
        %2382 = vmatpush1.msra.mxu0 0.0
        %2383 = vmatprep.subr.mxu0 0.0
        %2384 = vmatpush1.msra.mxu0 0.0
        %2385 = vmatprep.subr.mxu0 0.0
        %2386 = vmatpush1.msra.mxu0 0.0
        %2387 = vmatprep.subr.mxu0 0.0
        %2388 = vmatpush1.msra.mxu0 0.0
        %2389 = vmatprep.subr.mxu0 0.0
        %2390 = vmatpush1.msra.mxu0 0.0
        %2391 = vmatprep.subr.mxu0 0.0
        %2392 = vmatpush1.msra.mxu0 0.0
        %2393 = vmatprep.subr.mxu0 0.0
        %2394 = vmatpush1.msra.mxu0 0.0
        %2395 = vmatprep.subr.mxu0 0.0
        %2396 = vmatpush1.msra.mxu0 0.0
        %2397 = vmatprep.subr.mxu0 0.0
        %2398 = vmatpush1.msra.mxu0 0.0
        %2399 = vmatprep.subr.mxu0 0.0
        %2400 = vmatpush1.msra.mxu0 0.0
        %2401 = vmatprep.mubr.f32.mxu0 0.0
        %2402 = vmatmul.mubr.f32.gmra.mrb[0].mxu0 %v2335
        %v2403 = vpop.f32.mrb[0].mxu0
        %v2404 = vadd.f32 0.0, %v2403
        %v2405 = vpop.f32.mrb[0].mxu0
        %2406 = vdwg.mxu0
        %2409 = vset.pattern.permute.xlu0 0
        %2410 = vperm.xlu0 %2409, %v2028
        %v2411 = vpop.permute.xlu0 %2410
        %2412 = vset.pattern.permute.xlu0 0
        %2413 = vperm.xlu0 %2412, %v2030
        %v2414 = vpop.permute.xlu0 %2413
        %v2415 = vlaneseq
        %v2416 = vshrl.u32 %v2415, 7
        %v2417 = vsub.s32 %v1041, %v2416
        %v2418 = vrot.slane %v2411, %v2417
        %v2419 = vlaneseq
        %v2420 = vshrl.u32 %v2419, 7
        %v2421 = vsub.s32 %v1041, %v2420
        %v2422 = vrot.slane %v2414, %v2421
        %v2423 = vsel %vm1074, %v2422, %v2418
        %v2424 = vsel %vm1089, %v2423, 0
        %2426 = vmatprep.subr.mxu0 0.0
        %2427 = vmatpush1.msra.mxu0 %v2047
        %2428 = vmatprep.subr.mxu0 0.0
        %2429 = vmatpush1.msra.mxu0 0.0
        %2430 = vmatprep.subr.mxu0 0.0
        %2431 = vmatpush1.msra.mxu0 0.0
        %2432 = vmatprep.subr.mxu0 0.0
        %2433 = vmatpush1.msra.mxu0 0.0
        %2434 = vmatprep.subr.mxu0 0.0
        %2435 = vmatpush1.msra.mxu0 0.0
        %2436 = vmatprep.subr.mxu0 0.0
        %2437 = vmatpush1.msra.mxu0 0.0
        %2438 = vmatprep.subr.mxu0 0.0
        %2439 = vmatpush1.msra.mxu0 0.0
        %2440 = vmatprep.subr.mxu0 0.0
        %2441 = vmatpush1.msra.mxu0 0.0
        %2442 = vmatprep.subr.mxu0 0.0
        %2443 = vmatpush1.msra.mxu0 0.0
        %2444 = vmatprep.subr.mxu0 0.0
        %2445 = vmatpush1.msra.mxu0 0.0
        %2446 = vmatprep.subr.mxu0 0.0
        %2447 = vmatpush1.msra.mxu0 0.0
        %2448 = vmatprep.subr.mxu0 0.0
        %2449 = vmatpush1.msra.mxu0 0.0
        %2450 = vmatprep.subr.mxu0 0.0
        %2451 = vmatpush1.msra.mxu0 0.0
        %2452 = vmatprep.subr.mxu0 0.0
        %2453 = vmatpush1.msra.mxu0 0.0
        %2454 = vmatprep.subr.mxu0 0.0
        %2455 = vmatpush1.msra.mxu0 0.0
        %2456 = vmatprep.subr.mxu0 0.0
        %2457 = vmatpush1.msra.mxu0 0.0
        %2458 = vmatprep.subr.mxu0 0.0
        %2459 = vmatpush1.msra.mxu0 0.0
        %2460 = vmatprep.subr.mxu0 0.0
        %2461 = vmatpush1.msra.mxu0 0.0
        %2462 = vmatprep.subr.mxu0 0.0
        %2463 = vmatpush1.msra.mxu0 0.0
        %2464 = vmatprep.subr.mxu0 0.0
        %2465 = vmatpush1.msra.mxu0 0.0
        %2466 = vmatprep.subr.mxu0 0.0
        %2467 = vmatpush1.msra.mxu0 0.0
        %2468 = vmatprep.subr.mxu0 0.0
        %2469 = vmatpush1.msra.mxu0 0.0
        %2470 = vmatprep.subr.mxu0 0.0
        %2471 = vmatpush1.msra.mxu0 0.0
        %2472 = vmatprep.subr.mxu0 0.0
        %2473 = vmatpush1.msra.mxu0 0.0
        %2474 = vmatprep.subr.mxu0 0.0
        %2475 = vmatpush1.msra.mxu0 0.0
        %2476 = vmatprep.subr.mxu0 0.0
        %2477 = vmatpush1.msra.mxu0 0.0
        %2478 = vmatprep.subr.mxu0 0.0
        %2479 = vmatpush1.msra.mxu0 0.0
        %2480 = vmatprep.subr.mxu0 0.0
        %2481 = vmatpush1.msra.mxu0 0.0
        %2482 = vmatprep.subr.mxu0 0.0
        %2483 = vmatpush1.msra.mxu0 0.0
        %2484 = vmatprep.subr.mxu0 0.0
        %2485 = vmatpush1.msra.mxu0 0.0
        %2486 = vmatprep.subr.mxu0 0.0
        %2487 = vmatpush1.msra.mxu0 0.0
        %2488 = vmatprep.subr.mxu0 0.0
        %2489 = vmatpush1.msra.mxu0 0.0
        %2490 = vmatprep.mubr.f32.mxu0 0.0
        %2491 = vmatmul.mubr.f32.gmra.mrb[0].mxu0 %v2424
        %v2492 = vpop.f32.mrb[0].mxu0
        %v2493 = vadd.f32 0.0, %v2492
        %v2494 = vpop.f32.mrb[0].mxu0
        %2495 = vdwg.mxu0
        %2498 = vset.pattern.permute.xlu0 0
        %2499 = vperm.xlu0 %2498, %v2032
        %v2500 = vpop.permute.xlu0 %2499
        %2501 = vset.pattern.permute.xlu0 0
        %2502 = vperm.xlu0 %2501, %v2034
        %v2503 = vpop.permute.xlu0 %2502
        %v2504 = vlaneseq
        %v2505 = vshrl.u32 %v2504, 7
        %v2506 = vsub.s32 %v1041, %v2505
        %v2507 = vrot.slane %v2500, %v2506
        %v2508 = vlaneseq
        %v2509 = vshrl.u32 %v2508, 7
        %v2510 = vsub.s32 %v1041, %v2509
        %v2511 = vrot.slane %v2503, %v2510
        %v2512 = vsel %vm1074, %v2511, %v2507
        %v2513 = vsel %vm1089, %v2512, 0
        %2515 = vmatprep.subr.mxu0 0.0
        %2516 = vmatpush1.msra.mxu0 %v2048
        %2517 = vmatprep.subr.mxu0 0.0
        %2518 = vmatpush1.msra.mxu0 0.0
        %2519 = vmatprep.subr.mxu0 0.0
        %2520 = vmatpush1.msra.mxu0 0.0
        %2521 = vmatprep.subr.mxu0 0.0
        %2522 = vmatpush1.msra.mxu0 0.0
        %2523 = vmatprep.subr.mxu0 0.0
        %2524 = vmatpush1.msra.mxu0 0.0
        %2525 = vmatprep.subr.mxu0 0.0
        %2526 = vmatpush1.msra.mxu0 0.0
        %2527 = vmatprep.subr.mxu0 0.0
        %2528 = vmatpush1.msra.mxu0 0.0
        %2529 = vmatprep.subr.mxu0 0.0
        %2530 = vmatpush1.msra.mxu0 0.0
        %2531 = vmatprep.subr.mxu0 0.0
        %2532 = vmatpush1.msra.mxu0 0.0
        %2533 = vmatprep.subr.mxu0 0.0
        %2534 = vmatpush1.msra.mxu0 0.0
        %2535 = vmatprep.subr.mxu0 0.0
        %2536 = vmatpush1.msra.mxu0 0.0
        %2537 = vmatprep.subr.mxu0 0.0
        %2538 = vmatpush1.msra.mxu0 0.0
        %2539 = vmatprep.subr.mxu0 0.0
        %2540 = vmatpush1.msra.mxu0 0.0
        %2541 = vmatprep.subr.mxu0 0.0
        %2542 = vmatpush1.msra.mxu0 0.0
        %2543 = vmatprep.subr.mxu0 0.0
        %2544 = vmatpush1.msra.mxu0 0.0
        %2545 = vmatprep.subr.mxu0 0.0
        %2546 = vmatpush1.msra.mxu0 0.0
        %2547 = vmatprep.subr.mxu0 0.0
        %2548 = vmatpush1.msra.mxu0 0.0
        %2549 = vmatprep.subr.mxu0 0.0
        %2550 = vmatpush1.msra.mxu0 0.0
        %2551 = vmatprep.subr.mxu0 0.0
        %2552 = vmatpush1.msra.mxu0 0.0
        %2553 = vmatprep.subr.mxu0 0.0
        %2554 = vmatpush1.msra.mxu0 0.0
        %2555 = vmatprep.subr.mxu0 0.0
        %2556 = vmatpush1.msra.mxu0 0.0
        %2557 = vmatprep.subr.mxu0 0.0
        %2558 = vmatpush1.msra.mxu0 0.0
        %2559 = vmatprep.subr.mxu0 0.0
        %2560 = vmatpush1.msra.mxu0 0.0
        %2561 = vmatprep.subr.mxu0 0.0
        %2562 = vmatpush1.msra.mxu0 0.0
        %2563 = vmatprep.subr.mxu0 0.0
        %2564 = vmatpush1.msra.mxu0 0.0
        %2565 = vmatprep.subr.mxu0 0.0
        %2566 = vmatpush1.msra.mxu0 0.0
        %2567 = vmatprep.subr.mxu0 0.0
        %2568 = vmatpush1.msra.mxu0 0.0
        %2569 = vmatprep.subr.mxu0 0.0
        %2570 = vmatpush1.msra.mxu0 0.0
        %2571 = vmatprep.subr.mxu0 0.0
        %2572 = vmatpush1.msra.mxu0 0.0
        %2573 = vmatprep.subr.mxu0 0.0
        %2574 = vmatpush1.msra.mxu0 0.0
        %2575 = vmatprep.subr.mxu0 0.0
        %2576 = vmatpush1.msra.mxu0 0.0
        %2577 = vmatprep.subr.mxu0 0.0
        %2578 = vmatpush1.msra.mxu0 0.0
        %2579 = vmatprep.mubr.f32.mxu0 0.0
        %2580 = vmatmul.mubr.f32.gmra.mrb[0].mxu0 %v2513
        %v2581 = vpop.f32.mrb[0].mxu0
        %v2582 = vadd.f32 0.0, %v2581
        %v2583 = vpop.f32.mrb[0].mxu0
        %2584 = vdwg.mxu0
        %2587 = vset.pattern.permute.xlu0 0
        %2588 = vperm.xlu0 %2587, %v2036
        %v2589 = vpop.permute.xlu0 %2588
        %2590 = vset.pattern.permute.xlu0 0
        %2591 = vperm.xlu0 %2590, %v2038
        %v2592 = vpop.permute.xlu0 %2591
        %v2593 = vlaneseq
        %v2594 = vshrl.u32 %v2593, 7
        %v2595 = vsub.s32 %v1041, %v2594
        %v2596 = vrot.slane %v2589, %v2595
        %v2597 = vlaneseq
        %v2598 = vshrl.u32 %v2597, 7
        %v2599 = vsub.s32 %v1041, %v2598
        %v2600 = vrot.slane %v2592, %v2599
        %v2601 = vsel %vm1074, %v2600, %v2596
        %v2602 = vsel %vm1089, %v2601, 0
        %2604 = vmatprep.subr.mxu0 0.0
        %2605 = vmatpush1.msra.mxu0 %v2049
        %2606 = vmatprep.subr.mxu0 0.0
        %2607 = vmatpush1.msra.mxu0 0.0
        %2608 = vmatprep.subr.mxu0 0.0
        %2609 = vmatpush1.msra.mxu0 0.0
        %2610 = vmatprep.subr.mxu0 0.0
        %2611 = vmatpush1.msra.mxu0 0.0
        %2612 = vmatprep.subr.mxu0 0.0
        %2613 = vmatpush1.msra.mxu0 0.0
        %2614 = vmatprep.subr.mxu0 0.0
        %2615 = vmatpush1.msra.mxu0 0.0
        %2616 = vmatprep.subr.mxu0 0.0
        %2617 = vmatpush1.msra.mxu0 0.0
        %2618 = vmatprep.subr.mxu0 0.0
        %2619 = vmatpush1.msra.mxu0 0.0
        %2620 = vmatprep.subr.mxu0 0.0
        %2621 = vmatpush1.msra.mxu0 0.0
        %2622 = vmatprep.subr.mxu0 0.0
        %2623 = vmatpush1.msra.mxu0 0.0
        %2624 = vmatprep.subr.mxu0 0.0
        %2625 = vmatpush1.msra.mxu0 0.0
        %2626 = vmatprep.subr.mxu0 0.0
        %2627 = vmatpush1.msra.mxu0 0.0
        %2628 = vmatprep.subr.mxu0 0.0
        %2629 = vmatpush1.msra.mxu0 0.0
        %2630 = vmatprep.subr.mxu0 0.0
        %2631 = vmatpush1.msra.mxu0 0.0
        %2632 = vmatprep.subr.mxu0 0.0
        %2633 = vmatpush1.msra.mxu0 0.0
        %2634 = vmatprep.subr.mxu0 0.0
        %2635 = vmatpush1.msra.mxu0 0.0
        %2636 = vmatprep.subr.mxu0 0.0
        %2637 = vmatpush1.msra.mxu0 0.0
        %2638 = vmatprep.subr.mxu0 0.0
        %2639 = vmatpush1.msra.mxu0 0.0
        %2640 = vmatprep.subr.mxu0 0.0
        %2641 = vmatpush1.msra.mxu0 0.0
        %2642 = vmatprep.subr.mxu0 0.0
        %2643 = vmatpush1.msra.mxu0 0.0
        %2644 = vmatprep.subr.mxu0 0.0
        %2645 = vmatpush1.msra.mxu0 0.0
        %2646 = vmatprep.subr.mxu0 0.0
        %2647 = vmatpush1.msra.mxu0 0.0
        %2648 = vmatprep.subr.mxu0 0.0
        %2649 = vmatpush1.msra.mxu0 0.0
        %2650 = vmatprep.subr.mxu0 0.0
        %2651 = vmatpush1.msra.mxu0 0.0
        %2652 = vmatprep.subr.mxu0 0.0
        %2653 = vmatpush1.msra.mxu0 0.0
        %2654 = vmatprep.subr.mxu0 0.0
        %2655 = vmatpush1.msra.mxu0 0.0
        %2656 = vmatprep.subr.mxu0 0.0
        %2657 = vmatpush1.msra.mxu0 0.0
        %2658 = vmatprep.subr.mxu0 0.0
        %2659 = vmatpush1.msra.mxu0 0.0
        %2660 = vmatprep.subr.mxu0 0.0
        %2661 = vmatpush1.msra.mxu0 0.0
        %2662 = vmatprep.subr.mxu0 0.0
        %2663 = vmatpush1.msra.mxu0 0.0
        %2664 = vmatprep.subr.mxu0 0.0
        %2665 = vmatpush1.msra.mxu0 0.0
        %2666 = vmatprep.subr.mxu0 0.0
        %2667 = vmatpush1.msra.mxu0 0.0
        %2668 = vmatprep.mubr.f32.mxu0 0.0
        %2669 = vmatmul.mubr.f32.gmra.mrb[0].mxu0 %v2602
        %v2670 = vpop.f32.mrb[0].mxu0
        %v2671 = vadd.f32 0.0, %v2670
        %v2672 = vpop.f32.mrb[0].mxu0
        %2673 = vdwg.mxu0
        %2676 = vset.pattern.permute.xlu0 0
        %2677 = vperm.xlu0 %2676, %v2040
        %v2678 = vpop.permute.xlu0 %2677
        %2679 = vset.pattern.permute.xlu0 0
        %2680 = vperm.xlu0 %2679, %v2042
        %v2681 = vpop.permute.xlu0 %2680
        %v2682 = vlaneseq
        %v2683 = vshrl.u32 %v2682, 7
        %v2684 = vsub.s32 %v1041, %v2683
        %v2685 = vrot.slane %v2678, %v2684
        %v2686 = vlaneseq
        %v2687 = vshrl.u32 %v2686, 7
        %v2688 = vsub.s32 %v1041, %v2687
        %v2689 = vrot.slane %v2681, %v2688
        %v2690 = vsel %vm1074, %v2689, %v2685
        %v2691 = vsel %vm1089, %v2690, 0
        %2693 = vmatprep.subr.mxu0 0.0
        %2694 = vmatpush1.msra.mxu0 %v2050
        %2695 = vmatprep.subr.mxu0 0.0
        %2696 = vmatpush1.msra.mxu0 0.0
        %2697 = vmatprep.subr.mxu0 0.0
        %2698 = vmatpush1.msra.mxu0 0.0
        %2699 = vmatprep.subr.mxu0 0.0
        %2700 = vmatpush1.msra.mxu0 0.0
        %2701 = vmatprep.subr.mxu0 0.0
        %2702 = vmatpush1.msra.mxu0 0.0
        %2703 = vmatprep.subr.mxu0 0.0
        %2704 = vmatpush1.msra.mxu0 0.0
        %2705 = vmatprep.subr.mxu0 0.0
        %2706 = vmatpush1.msra.mxu0 0.0
        %2707 = vmatprep.subr.mxu0 0.0
        %2708 = vmatpush1.msra.mxu0 0.0
        %2709 = vmatprep.subr.mxu0 0.0
        %2710 = vmatpush1.msra.mxu0 0.0
        %2711 = vmatprep.subr.mxu0 0.0
        %2712 = vmatpush1.msra.mxu0 0.0
        %2713 = vmatprep.subr.mxu0 0.0
        %2714 = vmatpush1.msra.mxu0 0.0
        %2715 = vmatprep.subr.mxu0 0.0
        %2716 = vmatpush1.msra.mxu0 0.0
        %2717 = vmatprep.subr.mxu0 0.0
        %2718 = vmatpush1.msra.mxu0 0.0
        %2719 = vmatprep.subr.mxu0 0.0
        %2720 = vmatpush1.msra.mxu0 0.0
        %2721 = vmatprep.subr.mxu0 0.0
        %2722 = vmatpush1.msra.mxu0 0.0
        %2723 = vmatprep.subr.mxu0 0.0
        %2724 = vmatpush1.msra.mxu0 0.0
        %2725 = vmatprep.subr.mxu0 0.0
        %2726 = vmatpush1.msra.mxu0 0.0
        %2727 = vmatprep.subr.mxu0 0.0
        %2728 = vmatpush1.msra.mxu0 0.0
        %2729 = vmatprep.subr.mxu0 0.0
        %2730 = vmatpush1.msra.mxu0 0.0
        %2731 = vmatprep.subr.mxu0 0.0
        %2732 = vmatpush1.msra.mxu0 0.0
        %2733 = vmatprep.subr.mxu0 0.0
        %2734 = vmatpush1.msra.mxu0 0.0
        %2735 = vmatprep.subr.mxu0 0.0
        %2736 = vmatpush1.msra.mxu0 0.0
        %2737 = vmatprep.subr.mxu0 0.0
        %2738 = vmatpush1.msra.mxu0 0.0
        %2739 = vmatprep.subr.mxu0 0.0
        %2740 = vmatpush1.msra.mxu0 0.0
        %2741 = vmatprep.subr.mxu0 0.0
        %2742 = vmatpush1.msra.mxu0 0.0
        %2743 = vmatprep.subr.mxu0 0.0
        %2744 = vmatpush1.msra.mxu0 0.0
        %2745 = vmatprep.subr.mxu0 0.0
        %2746 = vmatpush1.msra.mxu0 0.0
        %2747 = vmatprep.subr.mxu0 0.0
        %2748 = vmatpush1.msra.mxu0 0.0
        %2749 = vmatprep.subr.mxu0 0.0
        %2750 = vmatpush1.msra.mxu0 0.0
        %2751 = vmatprep.subr.mxu0 0.0
        %2752 = vmatpush1.msra.mxu0 0.0
        %2753 = vmatprep.subr.mxu0 0.0
        %2754 = vmatpush1.msra.mxu0 0.0
        %2755 = vmatprep.subr.mxu0 0.0
        %2756 = vmatpush1.msra.mxu0 0.0
        %2757 = vmatprep.mubr.f32.mxu0 0.0
        %2758 = vmatmul.mubr.f32.gmra.mrb[0].mxu0 %v2691
        %v2759 = vpop.f32.mrb[0].mxu0
        %v2760 = vadd.f32 0.0, %v2759
        %v2761 = vpop.f32.mrb[0].mxu0
        %2762 = vdwg.mxu0
        %v2763 = vcombine.low %v2137, %v2315
        %v2765 = vunpack.c.l.s4 1983009808
        %v2766 = vunpack.c.0.s8 %v2765
        %v2767 = vlaneseq
        %v2768 = vshrl.u32 %v2767, 7
        %v2769 = vsub.s32 %v2766, %v2768
        %v2770 = vrot.slane %v2763, %v2769
        %v2771 = vcombine.low %v2226, %v2404
        %v2773 = vunpack.c.l.s4 1983009808
        %v2774 = vunpack.c.0.s8 %v2773
        %v2775 = vlaneseq
        %v2776 = vshrl.u32 %v2775, 7
        %v2777 = vsub.s32 %v2774, %v2776
        %v2778 = vrot.slane %v2771, %v2777
        %v2779 = vcombine.low %v2493, %v2671
        %v2781 = vunpack.c.l.s4 1983009808
        %v2782 = vunpack.c.0.s8 %v2781
        %v2783 = vlaneseq
        %v2784 = vshrl.u32 %v2783, 7
        %v2785 = vsub.s32 %v2782, %v2784
        %v2786 = vrot.slane %v2779, %v2785
        %v2787 = vcombine.low %v2582, %v2760
        %v2789 = vunpack.c.l.s4 1983009808
        %v2790 = vunpack.c.0.s8 %v2789
        %v2791 = vlaneseq
        %v2792 = vshrl.u32 %v2791, 7
        %v2793 = vsub.s32 %v2790, %v2792
        %v2794 = vrot.slane %v2787, %v2793
        %v2795 = vcombine.low %v2770, %v2778
        %v2797 = vunpack.c.l.s4 1934713408
        %v2798 = vunpack.c.0.s8 %v2797
        %v2799 = vlaneseq
        %v2800 = vshrl.u32 %v2799, 7
        %v2801 = vsub.s32 %v2798, %v2800
        %v2802 = vrot.slane %v2795, %v2801
        %v2803 = vcombine.low %v2786, %v2794
        %v2805 = vunpack.c.l.s4 1934713408
        %v2806 = vunpack.c.0.s8 %v2805
        %v2807 = vlaneseq
        %v2808 = vshrl.u32 %v2807, 7
        %v2809 = vsub.s32 %v2806, %v2808
        %v2810 = vrot.slane %v2803, %v2809
        %v2811 = vcombine.low %v2802, %v2810
        %v2812 = vcombine.high %v2802, %v2810
        %2813 = vst [vmem:[%s529] sm:$0xff] %v2811
        %2814 = vst [vmem:[%s529 + $0x8] sm:$0xff] %v2812
        %s2815 = sand.u32 %s313, 1
        %s2816 = scalar_lea.sflag [#allocation4], %s2815
        %s2817 = sand.u32 %s313, 1
        %s2818 = smul.addr %s2817, 16
        %s2819 = scalar_lea.vmem [#allocation10], %s2818
        // Predicated region
        $region85: #{tpu_custom_call.1} parent=67 // pred_check
          %p2820 = pneg %p323
        $region86: #{tpu_custom_call.1} parent=67 // pred_check_branch
          %2822 = sbr.rel (%p2820) target = $region88
        $region87: #{tpu_custom_call.1} parent=67 // pred_region
          %s2824 = ssub.s32 256, 256
          %2825 = vsyncadd %s2816, %s2824
          %s2826 = smul.addr %s33, 2
          %s2827 = smul.addr %s2826, 128
          %s2828 = scalar_lea.hbm %s12, %s2827
          %s2830 = sshll.u32 %s2819, 4
          %s2831 = int_to_ptr.vmem [resolvable:$true] %s2830
          %2833 = dma.vmem_to_hbm [thread:$0]  %s2831, 256, %s2828, %s2816
        $region88: #{tpu_custom_call.1} parent=67 // pred_fallthru
          _
      $region68: #{tpu_custom_call.1} parent=5 // pred_fallthru
        _
      %p2834 = scmp.le.s32.totalorder 2, %s28
      // Predicated region
      $region89: #{tpu_custom_call.1} parent=5 // pred_check
        %p2835 = pneg %p2834
      $region90: #{tpu_custom_call.1} parent=5 // pred_check_branch
        %2837 = sbr.rel (%p2835) target = $region92
      $region91: #{tpu_custom_call.1} parent=5 // pred_region
        %s2838 = ssub.s32 %s28, 2
        // Predicated region
        $region93: #{tpu_custom_call.1} parent=91 // pred_check
          %p2839 = pneg %p329
        $region94: #{tpu_custom_call.1} parent=91 // pred_check_branch
          %2841 = sbr.rel (%p2839) target = $region96
        $region95: #{tpu_custom_call.1} parent=91 // pred_region
          %s2842 = sand.u32 %s314, 1
          %s2843 = scalar_lea.sflag [#allocation4], %s2842
          %s2844 = sand.u32 %s314, 1
          %s2845 = smul.addr %s2844, 16
          %s2846 = scalar_lea.vmem [#allocation10], %s2845
          %2847 = dma.done %s2843, 256
        $region96: #{tpu_custom_call.1} parent=91 // pred_fallthru
          _
      $region92: #{tpu_custom_call.1} parent=5 // pred_fallthru
        _
    $region6: #{tpu_custom_call.1} parent=1 // loop_footer
      %s32 = sadd.s32 1, %s28
    $region7: #{tpu_custom_call.1} parent=1 // loop_footer_branch
      %27 = sbr.rel target = $region3
    $region8: #{tpu_custom_call.1} parent=1 // loop_exit
      _
    %2848 = vsyncpa [#allocation3], 1
    %s2849 = scalar_lea.sflag [#allocation3], 1
    %2850 = vsyncpa %s2849, 1
    %2851 = vsyncpa [#allocation6], 1
    %s2852 = scalar_lea.sflag [#allocation6], 1
    %2853 = vsyncpa %s2852, 1
    %2854 = vsyncpa [#allocation9], 1
    %2855 = vsyncpa [#allocation4], 1
    %s2856 = scalar_lea.sflag [#allocation4], 1
    %2857 = vsyncpa %s2856, 1

</llo_original>
